<compile_context>
chip_gen: v6e
topology: v6e:2x2x1
jax: 0.10.0
libtpu: 0.0.40
codegen_flags: <defaults>
</compile_context>

<pallas_src>
import functools

import jax
import jax.numpy as jnp
from jax.experimental import pallas as pl
from jax.experimental.pallas import tpu as pltpu

# ----- model sizes (consistent with MLP.forward; rep sizes are arbitrary ints) -----
D_IN = 16          # rep_in.size()
CH = 384           # hidden width (module default ch=384)
NUM_LAYERS = 3     # number of Linear+Swish blocks
D_OUT = 24         # rep_out.size()


# ----------------------------- kernel ---------------------------------------------
def mlp_kernel(x_ref, w1_ref, wh_ref, b_ref, out_ref, *, act_dtype):
    """Fused NUM_LAYERS x (Linear + Swish) + final Linear on one row tile.

    x_ref : (TM, D_IN)            f32
    w1_ref: (D_IN, CH)            bf16
    wh_ref: (NUM_LAYERS, CH, CH)  bf16   -- [w2, w3, w4 zero-padded to CH lanes]
    b_ref : (NUM_LAYERS+1, CH)    f32    -- [b1, b2, b3, b4 zero-padded]
    out_ref: (TM, CH)             f32    -- lane-dense, sliced to D_OUT in wrapper
    """

    def linear(h, w, b_row):
        # bf16 operands into the MXU, f32 accumulation, f32 bias add on the VPU.
        return jnp.dot(h.astype(jnp.bfloat16), w,
                       preferred_element_type=jnp.float32) + b_row

    def swish(y):
        # sigmoid via EUP exp + approximate EUP reciprocal (no VALU divide).
        s = pl.reciprocal(1.0 + jnp.exp(-y), approx=True)
        return (y * s).astype(act_dtype)

    h = swish(linear(x_ref[...], w1_ref[...], b_ref[0:1, :]))        # (TM, CH)
    for li in range(1, NUM_LAYERS):                                   # hidden blocks
        h = swish(linear(h, wh_ref[li - 1], b_ref[li:li + 1, :]))     # (TM, CH)
    # final Linear (no activation), zero-padded to CH lanes for an unmasked store
    out_ref[...] = linear(h, wh_ref[NUM_LAYERS - 1],
                          b_ref[NUM_LAYERS:NUM_LAYERS + 1, :])


# ----------------------------- wrapper --------------------------------------------
def _chip_kind():
    return jax.devices()[0].device_kind.lower()


def _use_bf16_activations():
    # bf16 VPU/EUP exist on v6e / v7x; keep f32 activations elsewhere (v4/v5e/v5p).
    k = _chip_kind()
    return any(tag in k for tag in ("v6", "v7", "7x"))


def _default_tm(batch):
    # 256-row tiles on v6e/v7x (2x256^2 MXU), 128 on v5e; small batches round up to 8.
    big = 256 if _use_bf16_activations() else 128
    if batch >= big:
        return big
    if batch >= 128:
        return 128
    return max(8, -(-batch // 8) * 8)


def mlp_forward(x, params, *, tm=None):
    """x: (B, D_IN) f32 -> (B, D_OUT) f32.  params = (w1, wh_packed, bias_packed)."""
    w1, wh, bias = params
    batch, d_in = x.shape
    assert d_in == D_IN

    if tm is None:
        tm = _default_tm(batch)
    n_tiles = -(-batch // tm)              # ceil-div: remainder rows are padded,
    b_pad = n_tiles * tm                   # computed, and sliced off below.
    if b_pad != batch:
        x = jnp.pad(x, ((0, b_pad - batch), (0, 0)))

    act_dtype = jnp.bfloat16 if _use_bf16_activations() else jnp.float32

    def const_spec(shape):
        # constant across the row grid -> single-buffered (no wasted double buffer)
        return pl.BlockSpec(shape, lambda i: (0,) * len(shape),
                            pipeline_mode=pl.Buffered(1))

    out = pl.pallas_call(
        functools.partial(mlp_kernel, act_dtype=act_dtype),
        out_shape=jax.ShapeDtypeStruct((b_pad, CH), jnp.float32),
        grid_spec=pltpu.PrefetchScalarGridSpec(
            num_scalar_prefetch=0,
            grid=(n_tiles,),
            in_specs=[
                pl.BlockSpec((tm, D_IN), lambda i: (i, 0)),      # row tile
                const_spec((D_IN, CH)),                          # w1
                const_spec((NUM_LAYERS, CH, CH)),                # packed w2/w3/w4
                const_spec((NUM_LAYERS + 1, CH)),                # packed biases
            ],
            out_specs=pl.BlockSpec((tm, CH), lambda i: (i, 0)),
        ),
        compiler_params=pltpu.CompilerParams(
            dimension_semantics=("parallel",)),
    )(x, w1, wh, bias)
    return out[:batch, :D_OUT]


# ----------------------------- params & reference ---------------------------------
def make_params(key):
    """Deterministic synthetic parameters matching MLP.__init__ shapes, packed for the
    kernel: w1 (D_IN,CH) bf16; wh (NUM_LAYERS,CH,CH) bf16 with the final (CH,D_OUT)
    weight zero-padded to CH lanes; bias (NUM_LAYERS+1,CH) f32 (last row zero-padded)."""
    dims = [D_IN] + NUM_LAYERS * [CH] + [D_OUT]
    ks = jax.random.split(key, 2 * (NUM_LAYERS + 1))
    ws, bs = [], []
    for li, (cin, cout) in enumerate(zip(dims, dims[1:])):
        w = jax.random.normal(ks[2 * li], (cin, cout), jnp.float32) / jnp.sqrt(cin)
        b = jax.random.normal(ks[2 * li + 1], (cout,), jnp.float32) * 0.1
        ws.append(w)
        bs.append(b)
    w1 = ws[0].astype(jnp.bfloat16)
    w_last = jnp.pad(ws[-1], ((0, 0), (0, CH - D_OUT)))
    wh = jnp.stack(ws[1:-1] + [w_last]).astype(jnp.bfloat16)
    b_last = jnp.pad(bs[-1], (0, CH - D_OUT))
    bias = jnp.stack(bs[:-1] + [b_last]).astype(jnp.float32)
    return w1, wh, bias


def reference(x, params):
    """Pure-JAX reference mirroring the kernel's dtype path (bf16 MXU, f32 accumulate,
    generation-gated activation dtype); sigmoid is the exact jax.nn.sigmoid."""
    w1, wh, bias = params
    act_dtype = jnp.bfloat16 if _use_bf16_activations() else jnp.float32
    h = x
    ws = [w1] + [wh[i] for i in range(NUM_LAYERS - 1)]
    for li, w in enumerate(ws):
        y = jnp.dot(h.astype(jnp.bfloat16), w,
                    preferred_element_type=jnp.float32) + bias[li][None, :]
        h = (y * jax.nn.sigmoid(y)).astype(act_dtype)
    y = jnp.dot(h.astype(jnp.bfloat16), wh[NUM_LAYERS - 1],
                preferred_element_type=jnp.float32) + bias[NUM_LAYERS][None, :]
    return y[:, :D_OUT]


# ----------------------------- self-test ------------------------------------------
if __name__ == "__main__":
    key = jax.random.PRNGKey(0)
    kx, kx2, kp = jax.random.split(key, 3)
    params = make_params(kp)
    fwd = jax.jit(mlp_forward)

    # small batch: single grid step
    x = jax.random.normal(kx, (16, D_IN), jnp.float32)
    out = jax.block_until_ready(fwd(x, params))
    ref = reference(x, params)
    assert out.shape == (16, D_OUT)
    assert jnp.allclose(out, ref, rtol=2e-2, atol=2e-2), "mismatch (small batch)"

    # non-multiple batch: multi-step parallel row grid + remainder padding
    x2 = jax.random.normal(kx2, (200, D_IN), jnp.float32)
    out2 = jax.block_until_ready(fwd(x2, params))
    ref2 = reference(x2, params)
    assert out2.shape == (200, D_OUT)
    assert jnp.allclose(out2, ref2, rtol=2e-2, atol=2e-2), "mismatch (tiled batch)"

    print("KERNEL_OK")
</pallas_src>

<mosaic_0001>
module attributes {stable_mosaic.version = 11 : i64} {
  func.func @mlp_kernel(%arg0: i32, %arg1: memref<16x16xf32, #tpu.memory_space<vmem>>, %arg2: memref<16x384xbf16, #tpu.memory_space<vmem>>, %arg3: memref<3x384x384xbf16, #tpu.memory_space<vmem>>, %arg4: memref<4x384xf32, #tpu.memory_space<vmem>>, %arg5: memref<16x384xf32, #tpu.memory_space<vmem>>) attributes {dimension_semantics = [#tpu.dimension_semantics<parallel>], iteration_bounds = array<i64: 1>, scalar_prefetch = 0 : i64, scratch_operands = 0 : i64, tpu.core_type = #tpu.core_type<tc>, window_params = [{transform_indices = @transform_0, window_bounds = array<i64: 16, 16>}, {pipeline_mode = #tpu.pipeline_mode<synchronous>, transform_indices = @transform_1, window_bounds = array<i64: 16, 384>}, {pipeline_mode = #tpu.pipeline_mode<synchronous>, transform_indices = @transform_2, window_bounds = array<i64: 3, 384, 384>}, {pipeline_mode = #tpu.pipeline_mode<synchronous>, transform_indices = @transform_3, window_bounds = array<i64: 4, 384>}, {transform_indices = @transform_4, window_bounds = array<i64: 16, 384>}]} {
    %c0 = arith.constant 0 : index
    %c0_0 = arith.constant 0 : index
    %0 = vector.load %arg1[%c0, %c0_0] : memref<16x16xf32, #tpu.memory_space<vmem>>, vector<16x16xf32>
    %c0_1 = arith.constant 0 : index
    %c0_2 = arith.constant 0 : index
    %1 = vector.load %arg2[%c0_1, %c0_2] : memref<16x384xbf16, #tpu.memory_space<vmem>>, vector<16x384xbf16>
    %c0_3 = arith.constant 0 : index
    %c0_4 = arith.constant 0 : index
    %2 = vector.load %arg4[%c0_3, %c0_4] : memref<4x384xf32, #tpu.memory_space<vmem>>, vector<1x384xf32>
    %3 = arith.truncf %0 : vector<16x16xf32> to vector<16x16xbf16>
    %cst = arith.constant dense<0.000000e+00> : vector<16x384xf32>
    %4 = tpu.matmul %3, %1, %cst {dimension_numbers = #tpu.dot_dimension_numbers<[1], [0], [0], [1], [0, 0, 1, 1], [], []>} : vector<16x16xbf16>, vector<16x384xbf16>, vector<16x384xf32> -> vector<16x384xf32>
    %5 = vector.broadcast %2 : vector<1x384xf32> to vector<16x384xf32>
    %6 = arith.addf %4, %5 : vector<16x384xf32>
    %cst_5 = arith.constant 0.000000e+00 : f32
    %7 = vector.broadcast %cst_5 : f32 to vector<16x384xf32>
    %8 = arith.subf %7, %6 : vector<16x384xf32>
    %9 = math.exp %8 : vector<16x384xf32>
    %cst_6 = arith.constant 1.000000e+00 : f32
    %10 = vector.broadcast %cst_6 : f32 to vector<16x384xf32>
    %11 = arith.addf %10, %9 : vector<16x384xf32>
    %12 = tpu.reciprocal %11 {approx = true} : vector<16x384xf32> -> vector<16x384xf32>
    %13 = arith.mulf %6, %12 : vector<16x384xf32>
    %c0_7 = arith.constant 0 : index
    %c0_8 = arith.constant 0 : index
    %c0_9 = arith.constant 0 : index
    %14 = vector.load %arg3[%c0_7, %c0_8, %c0_9] : memref<3x384x384xbf16, #tpu.memory_space<vmem>>, vector<1x384x384xbf16>
    %15 = vector.shape_cast %14 : vector<1x384x384xbf16> to vector<384x384xbf16>
    %c1 = arith.constant 1 : index
    %c0_10 = arith.constant 0 : index
    %16 = vector.load %arg4[%c1, %c0_10] : memref<4x384xf32, #tpu.memory_space<vmem>>, vector<1x384xf32>
    %17 = arith.truncf %13 : vector<16x384xf32> to vector<16x384xbf16>
    %cst_11 = arith.constant dense<0.000000e+00> : vector<16x384xf32>
    %18 = tpu.matmul %17, %15, %cst_11 {dimension_numbers = #tpu.dot_dimension_numbers<[1], [0], [0], [1], [0, 0, 1, 1], [], []>} : vector<16x384xbf16>, vector<384x384xbf16>, vector<16x384xf32> -> vector<16x384xf32>
    %19 = vector.broadcast %16 : vector<1x384xf32> to vector<16x384xf32>
    %20 = arith.addf %18, %19 : vector<16x384xf32>
    %cst_12 = arith.constant 0.000000e+00 : f32
    %21 = vector.broadcast %cst_12 : f32 to vector<16x384xf32>
    %22 = arith.subf %21, %20 : vector<16x384xf32>
    %23 = math.exp %22 : vector<16x384xf32>
    %cst_13 = arith.constant 1.000000e+00 : f32
    %24 = vector.broadcast %cst_13 : f32 to vector<16x384xf32>
    %25 = arith.addf %24, %23 : vector<16x384xf32>
    %26 = tpu.reciprocal %25 {approx = true} : vector<16x384xf32> -> vector<16x384xf32>
    %27 = arith.mulf %20, %26 : vector<16x384xf32>
    %c1_14 = arith.constant 1 : index
    %c0_15 = arith.constant 0 : index
    %c0_16 = arith.constant 0 : index
    %28 = vector.load %arg3[%c1_14, %c0_15, %c0_16] : memref<3x384x384xbf16, #tpu.memory_space<vmem>>, vector<1x384x384xbf16>
    %29 = vector.shape_cast %28 : vector<1x384x384xbf16> to vector<384x384xbf16>
    %c2 = arith.constant 2 : index
    %c0_17 = arith.constant 0 : index
    %30 = vector.load %arg4[%c2, %c0_17] : memref<4x384xf32, #tpu.memory_space<vmem>>, vector<1x384xf32>
    %31 = arith.truncf %27 : vector<16x384xf32> to vector<16x384xbf16>
    %cst_18 = arith.constant dense<0.000000e+00> : vector<16x384xf32>
    %32 = tpu.matmul %31, %29, %cst_18 {dimension_numbers = #tpu.dot_dimension_numbers<[1], [0], [0], [1], [0, 0, 1, 1], [], []>} : vector<16x384xbf16>, vector<384x384xbf16>, vector<16x384xf32> -> vector<16x384xf32>
    %33 = vector.broadcast %30 : vector<1x384xf32> to vector<16x384xf32>
    %34 = arith.addf %32, %33 : vector<16x384xf32>
    %cst_19 = arith.constant 0.000000e+00 : f32
    %35 = vector.broadcast %cst_19 : f32 to vector<16x384xf32>
    %36 = arith.subf %35, %34 : vector<16x384xf32>
    %37 = math.exp %36 : vector<16x384xf32>
    %cst_20 = arith.constant 1.000000e+00 : f32
    %38 = vector.broadcast %cst_20 : f32 to vector<16x384xf32>
    %39 = arith.addf %38, %37 : vector<16x384xf32>
    %40 = tpu.reciprocal %39 {approx = true} : vector<16x384xf32> -> vector<16x384xf32>
    %41 = arith.mulf %34, %40 : vector<16x384xf32>
    %c2_21 = arith.constant 2 : index
    %c0_22 = arith.constant 0 : index
    %c0_23 = arith.constant 0 : index
    %42 = vector.load %arg3[%c2_21, %c0_22, %c0_23] : memref<3x384x384xbf16, #tpu.memory_space<vmem>>, vector<1x384x384xbf16>
    %43 = vector.shape_cast %42 : vector<1x384x384xbf16> to vector<384x384xbf16>
    %c3 = arith.constant 3 : index
    %c0_24 = arith.constant 0 : index
    %44 = vector.load %arg4[%c3, %c0_24] : memref<4x384xf32, #tpu.memory_space<vmem>>, vector<1x384xf32>
    %45 = arith.truncf %41 : vector<16x384xf32> to vector<16x384xbf16>
    %cst_25 = arith.constant dense<0.000000e+00> : vector<16x384xf32>
    %46 = tpu.matmul %45, %43, %cst_25 {dimension_numbers = #tpu.dot_dimension_numbers<[1], [0], [0], [1], [0, 0, 1, 1], [], []>} : vector<16x384xbf16>, vector<384x384xbf16>, vector<16x384xf32> -> vector<16x384xf32>
    %47 = vector.broadcast %44 : vector<1x384xf32> to vector<16x384xf32>
    %48 = arith.addf %46, %47 : vector<16x384xf32>
    %c0_26 = arith.constant 0 : index
    %c0_27 = arith.constant 0 : index
    %49 = vector.load %arg5[%c0_26, %c0_27] : memref<16x384xf32, #tpu.memory_space<vmem>>, vector<16x384xf32>
    tpu.vector_store %arg5[%c0_26, %c0_27], %48 {strides = array<i32>} : memref<16x384xf32, #tpu.memory_space<vmem>>, vector<16x384xf32>,
    return
  }
  func.func @transform_0(%arg0: i32) -> (i32, i32) {
    %c0_i32 = arith.constant 0 : i32
    %c0_i32_0 = arith.constant 0 : i32
    return %arg0, %c0_i32 : i32, i32
  }
  func.func @transform_1(%arg0: i32) -> (i32, i32) {
    %c0_i32 = arith.constant 0 : i32
    %c0_i32_0 = arith.constant 0 : i32
    %c0_i32_1 = arith.constant 0 : i32
    return %c0_i32, %c0_i32_0 : i32, i32
  }
  func.func @transform_2(%arg0: i32) -> (i32, i32, i32) {
    %c0_i32 = arith.constant 0 : i32
    %c0_i32_0 = arith.constant 0 : i32
    %c0_i32_1 = arith.constant 0 : i32
    %c0_i32_2 = arith.constant 0 : i32
    return %c0_i32, %c0_i32_0, %c0_i32_1 : i32, i32, i32
  }
  func.func @transform_3(%arg0: i32) -> (i32, i32) {
    %c0_i32 = arith.constant 0 : i32
    %c0_i32_0 = arith.constant 0 : i32
    %c0_i32_1 = arith.constant 0 : i32
    return %c0_i32, %c0_i32_0 : i32, i32
  }
  func.func @transform_4(%arg0: i32) -> (i32, i32) {
    %c0_i32 = arith.constant 0 : i32
    %c0_i32_0 = arith.constant 0 : i32
    return %arg0, %c0_i32 : i32, i32
  }
}

</mosaic_0001>

<llo_original>
// kernel: mlp_forward.1
$region0: #{mlp_forward.1}
  #allocation0 [shape = 'u32[]', space=smem, size = 0x4, offset = 0x4, fixed_abs, tag = 'smem constant byte address 0x4 - core index']
  #allocation1 [shape = 'u32[144,128]{1,0:T(1,128)}', space=vmem, size = 0x12000, scoped, tag = 'internal scratch']
  %s0 = inlined_call_operand.hbm [shape: f32[16,16], index: 0, kind: input, shape index: {}]
  %s1 = inlined_call_operand.hbm [shape: bf16[16,384], index: 1, kind: input, shape index: {}]
  %s2 = inlined_call_operand.hbm [shape: bf16[3,384,384], index: 2, kind: input, shape index: {}]
  %s3 = inlined_call_operand.hbm [shape: f32[4,384], index: 3, kind: input, shape index: {}]
  %s4 = inlined_call_operand.vmem [shape: f32[16,384], index: 4, kind: output, shape index: {}]
  %s5 = sld [smem:[#allocation0]]
  $region42: #{mlp_forward.1} parent=0
    _
  %s7 = ssub.s32 1, %s5
  %s8 = scalar_select 0, %s7, %s5
  $region1: #{mlp_forward.1} parent=0
    #allocation2 [shape = 'u8[8192]{0}', space=vmem, size = 0x2000, scoped, tag = 'input window, operand 0, single buffered']
    #allocation3 [shape = 's32[1]{0}', space=sflag, size = 0x4, scoped, tag = 'scoped memory for mlp_forward.1']
    #allocation4 [shape = 'u8[12288]{0}', space=vmem, size = 0x3000, scoped, tag = 'input window, operand 1, single buffered']
    #allocation5 [shape = 's32[1]{0}', space=sflag, size = 0x4, scoped, tag = 'scoped memory for mlp_forward.1']
    #allocation6 [shape = 'u8[884736]{0}', space=vmem, size = 0xd8000, scoped, tag = 'input window, operand 2, single buffered']
    #allocation7 [shape = 'u8[6144]{0}', space=vmem, size = 0x1800, scoped, tag = 'input window, operand 3, single buffered']
    #allocation8 [shape = 's32[1]{0}', space=sflag, size = 0x4, scoped, tag = 'scoped memory for mlp_forward.1']
    %9 = vsyncpa [#allocation3], 0
    %10 = vsyncpa [#allocation5], 0
    %11 = vsyncpa [#allocation8], 0
    // Predicated region
    $region2: #{mlp_forward.1} parent=1 // pred_check
      _
    $region3: #{mlp_forward.1} parent=1 // pred_check_branch
      %13 = sbr.rel (0) target = $region5
    $region4: #{mlp_forward.1} parent=1 // pred_region
      %s15 = ssub.s32 256, 256
      %16 = vsyncadd [#allocation3], %s15
      %s17 = sshll.u32 [#allocation2], 4
      %s18 = int_to_ptr.vmem [resolvable:$true] %s17
      %23 = dma.hbm_to_vmem [thread:$0]  %s0, 256, %s18, [#allocation3], 128, 128, 8
    $region5: #{mlp_forward.1} parent=1 // pred_fallthru
      _
    // Predicated region
    $region6: #{mlp_forward.1} parent=1 // pred_check
      _
    $region7: #{mlp_forward.1} parent=1 // pred_check_branch
      %25 = sbr.rel (0) target = $region9
    $region8: #{mlp_forward.1} parent=1 // pred_region
      %s27 = ssub.s32 384, 384
      %28 = vsyncadd [#allocation5], %s27
      %s29 = sshll.u32 [#allocation4], 4
      %s30 = int_to_ptr.vmem [resolvable:$true] %s29
      %35 = dma.hbm_to_vmem [thread:$0]  %s1, 384, %s30, [#allocation5], 192, 192, 12
    $region9: #{mlp_forward.1} parent=1 // pred_fallthru
      _
    // Predicated region
    $region10: #{mlp_forward.1} parent=1 // pred_check
      _
    $region11: #{mlp_forward.1} parent=1 // pred_check_branch
      %37 = sbr.rel (0) target = $region13
    $region12: #{mlp_forward.1} parent=1 // pred_region
      %s39 = ssub.s32 27648, 27648
      %40 = vsyncadd [#allocation5], %s39
      %s41 = sshll.u32 [#allocation6], 4
      %s42 = int_to_ptr.vmem [resolvable:$true] %s41
      %47 = dma.hbm_to_vmem [thread:$0]  %s2, 27648, %s42, [#allocation5], 192, 192, 12
    $region13: #{mlp_forward.1} parent=1 // pred_fallthru
      _
    // Predicated region
    $region14: #{mlp_forward.1} parent=1 // pred_check
      _
    $region15: #{mlp_forward.1} parent=1 // pred_check_branch
      %49 = sbr.rel (0) target = $region17
    $region16: #{mlp_forward.1} parent=1 // pred_region
      %s51 = ssub.s32 192, 192
      %52 = vsyncadd [#allocation8], %s51
      %s54 = sshll.u32 [#allocation7], 4
      %s55 = int_to_ptr.vmem [resolvable:$true] %s54
      %57 = dma.hbm_to_vmem [thread:$0]  %s3, 192, %s55, [#allocation8]
    $region17: #{mlp_forward.1} parent=1 // pred_fallthru
      _
    // Predicated region
    $region18: #{mlp_forward.1} parent=1 // pred_check
      _
    $region19: #{mlp_forward.1} parent=1 // pred_check_branch
      %59 = sbr.rel (0) target = $region21
    $region20: #{mlp_forward.1} parent=1 // pred_region
      %60 = dma.done [#allocation3], 256
    $region21: #{mlp_forward.1} parent=1 // pred_fallthru
      _
    // Predicated region
    $region22: #{mlp_forward.1} parent=1 // pred_check
      _
    $region23: #{mlp_forward.1} parent=1 // pred_check_branch
      %62 = sbr.rel (0) target = $region25
    $region24: #{mlp_forward.1} parent=1 // pred_region
      %63 = dma.done [#allocation5], 384
    $region25: #{mlp_forward.1} parent=1 // pred_fallthru
      _
    // Predicated region
    $region26: #{mlp_forward.1} parent=1 // pred_check
      _
    $region27: #{mlp_forward.1} parent=1 // pred_check_branch
      %65 = sbr.rel (0) target = $region29
    $region28: #{mlp_forward.1} parent=1 // pred_region
      %66 = dma.done [#allocation5], 27648
    $region29: #{mlp_forward.1} parent=1 // pred_fallthru
      _
    // Predicated region
    $region30: #{mlp_forward.1} parent=1 // pred_check
      _
    $region31: #{mlp_forward.1} parent=1 // pred_check_branch
      %68 = sbr.rel (0) target = $region33
    $region32: #{mlp_forward.1} parent=1 // pred_region
      %69 = dma.done [#allocation8], 192
    $region33: #{mlp_forward.1} parent=1 // pred_fallthru
      _
    %v71 = vld [vmem:[#allocation2] sm:$0xff]
    %v72 = vld [vmem:[#allocation2 + $0x8] sm:$0xff]
    %v73 = vld [vmem:[#allocation4] sm:$0xff]
    %v74 = vld [vmem:[#allocation4 + $0x8] sm:$0xf]
    %v75 = vld [vmem:[#allocation4 + $0xc] sm:$0xff]
    %v76 = vld [vmem:[#allocation4 + $0x14] sm:$0xf]
    %v77 = vld [vmem:[#allocation7] ss:$4 sm:$0x7]
    %v78 = vpack.c.bf16 %v72, %v71
    %v80 = vlaneseq
    %v81 = vshrl.u32 %v80, 7
    %v82 = vsub.s32 0, %v81
    %v83 = vrot.slane %v77, %v82
    %v84 = vlaneseq
    %v85 = vshrl.u32 %v84, 7
    %v86 = vsub.s32 1, %v85
    %v87 = vrot.slane %v77, %v86
    %v88 = vlaneseq
    %v89 = vshrl.u32 %v88, 7
    %v90 = vsub.s32 2, %v89
    %v91 = vrot.slane %v77, %v90
    %v99 = vunpack.c.l.b16 %v73
    %v100 = vunpack.c.h.b16 %v73
    %v101 = vunpack.c.l.b16 %v74
    %v102 = vunpack.c.l.b16 %v75
    %v103 = vunpack.c.h.b16 %v75
    %v104 = vunpack.c.l.b16 %v76
    %v105 = vpack.c.b16 %v102, %v99
    %v106 = vpack.c.b16 %v103, %v100
    %v107 = vpack.c.b16 %v104, %v101
    %vm111 = vcmask 130048
    %v113 = vsel %vm111, %v78, 0
    %115 = vmatprep.subr.bf16.mxu0 0
    %116 = vmatpush1.bf16.msra.mxu0 0
    %117 = vmatprep.subr.bf16.mxu0 0
    %118 = vmatpush1.bf16.msra.mxu0 0
    %119 = vmatprep.subr.bf16.mxu0 0
    %120 = vmatpush1.bf16.msra.mxu0 0
    %121 = vmatprep.subr.bf16.mxu0 0
    %122 = vmatpush1.bf16.msra.mxu0 0
    %123 = vmatprep.subr.bf16.mxu0 0
    %124 = vmatpush1.bf16.msra.mxu0 0
    %125 = vmatprep.subr.bf16.mxu0 0
    %126 = vmatpush1.bf16.msra.mxu0 0
    %127 = vmatprep.subr.bf16.mxu0 0
    %128 = vmatpush1.bf16.msra.mxu0 0
    %129 = vmatprep.subr.bf16.mxu0 %v106
    %130 = vmatpush1.bf16.msra.mxu0 %v105
    %131 = vmatprep.subr.bf16.mxu0 0
    %132 = vmatpush2.bf16.msra.mxu0 0
    %133 = vmatprep.subr.bf16.mxu0 0
    %134 = vmatpush2.bf16.msra.mxu0 0
    %135 = vmatprep.subr.bf16.mxu0 0
    %136 = vmatpush2.bf16.msra.mxu0 0
    %137 = vmatprep.subr.bf16.mxu0 0
    %138 = vmatpush2.bf16.msra.mxu0 0
    %139 = vmatprep.subr.bf16.mxu0 0
    %140 = vmatpush2.bf16.msra.mxu0 0
    %141 = vmatprep.subr.bf16.mxu0 0
    %142 = vmatpush2.bf16.msra.mxu0 0
    %143 = vmatprep.subr.bf16.mxu0 0
    %144 = vmatpush2.bf16.msra.mxu0 0
    %145 = vmatprep.subr.bf16.mxu0 0
    %146 = vmatpush2.bf16.msra.mxu0 0
    %147 = vmatprep.mubr.bf16.mxu0 0
    %148 = vmatmul.mubr.bf16.gmra.mxu0 %v113
    %v149 = vpop.f32.mrf.mxu0
    %v150 = vadd.f32 %v83, %v149
    %v151 = vpop.f32.mrf.mxu0
    %v152 = vadd.f32 %v87, %v151
    %v153 = vpop.f32.mrf.mxu0
    %v154 = vadd.f32 %v83, %v153
    %v155 = vpop.f32.mrf.mxu0
    %v156 = vadd.f32 %v87, %v155
    %157 = vdwg.mxu0
    %158 = vmatprep.subr.bf16.mxu0 0
    %159 = vmatpush1.bf16.msra.mxu0 0
    %160 = vmatprep.subr.bf16.mxu0 0
    %161 = vmatpush1.bf16.msra.mxu0 0
    %162 = vmatprep.subr.bf16.mxu0 0
    %163 = vmatpush1.bf16.msra.mxu0 0
    %164 = vmatprep.subr.bf16.mxu0 0
    %165 = vmatpush1.bf16.msra.mxu0 0
    %166 = vmatprep.subr.bf16.mxu0 0
    %167 = vmatpush1.bf16.msra.mxu0 0
    %168 = vmatprep.subr.bf16.mxu0 0
    %169 = vmatpush1.bf16.msra.mxu0 0
    %170 = vmatprep.subr.bf16.mxu0 0
    %171 = vmatpush1.bf16.msra.mxu0 0
    %172 = vmatprep.subr.bf16.mxu0 0
    %173 = vmatpush1.bf16.msra.mxu0 %v107
    %174 = vmatprep.subr.bf16.mxu0 0
    %175 = vmatpush2.bf16.msra.mxu0 0
    %176 = vmatprep.subr.bf16.mxu0 0
    %177 = vmatpush2.bf16.msra.mxu0 0
    %178 = vmatprep.subr.bf16.mxu0 0
    %179 = vmatpush2.bf16.msra.mxu0 0
    %180 = vmatprep.subr.bf16.mxu0 0
    %181 = vmatpush2.bf16.msra.mxu0 0
    %182 = vmatprep.subr.bf16.mxu0 0
    %183 = vmatpush2.bf16.msra.mxu0 0
    %184 = vmatprep.subr.bf16.mxu0 0
    %185 = vmatpush2.bf16.msra.mxu0 0
    %186 = vmatprep.subr.bf16.mxu0 0
    %187 = vmatpush2.bf16.msra.mxu0 0
    %188 = vmatprep.subr.bf16.mxu0 0
    %189 = vmatpush2.bf16.msra.mxu0 0
    %190 = vmatprep.mubr.bf16.mxu0 0
    %191 = vmatmul.mubr.bf16.gmra.mxu0 %v113
    %v192 = vpop.f32.mrf.mxu0
    %v193 = vadd.f32 %v91, %v192
    %v194 = vpop.f32.mrf.mxu0
    %v195 = vpop.f32.mrf.mxu0
    %v196 = vadd.f32 %v91, %v195
    %v197 = vpop.f32.mrf.mxu0
    %198 = vdwg.mxu0
    %v199 = vsub.f32 0.0, %v150
    %v200 = vsub.f32 0.0, %v152
    %v201 = vsub.f32 0.0, %v193
    %v202 = vsub.f32 0.0, %v154
    %v203 = vsub.f32 0.0, %v156
    %v204 = vsub.f32 0.0, %v196
    %v205 = vmul.f32 %v199, 1.442695
    %v206 = vpow.pop %v205
    %v207 = vmul.f32 %v200, 1.442695
    %v208 = vpow.pop %v207
    %v209 = vmul.f32 %v201, 1.442695
    %v210 = vpow.pop %v209
    %v211 = vmul.f32 %v202, 1.442695
    %v212 = vpow.pop %v211
    %v213 = vmul.f32 %v203, 1.442695
    %v214 = vpow.pop %v213
    %v215 = vmul.f32 %v204, 1.442695
    %v216 = vpow.pop %v215
    %v217 = vadd.f32 %v206, 1.0
    %v218 = vadd.f32 %v208, 1.0
    %v219 = vadd.f32 %v210, 1.0
    %v220 = vadd.f32 %v212, 1.0
    %v221 = vadd.f32 %v214, 1.0
    %v222 = vadd.f32 %v216, 1.0
    %v223 = vrcp.pop %v217
    %v224 = vrcp.pop %v218
    %v225 = vrcp.pop %v219
    %v226 = vrcp.pop %v220
    %v227 = vrcp.pop %v221
    %v228 = vrcp.pop %v222
    %v229 = vmul.f32 %v150, %v223
    %v230 = vmul.f32 %v152, %v224
    %v231 = vmul.f32 %v193, %v225
    %v232 = vmul.f32 %v154, %v226
    %v233 = vmul.f32 %v156, %v227
    %v234 = vmul.f32 %v196, %v228
    %v235 = vld [vmem:[#allocation6] sm:$0xff]
    %v236 = vld [vmem:[#allocation6 + $0x8] sm:$0xf]
    %v237 = vld [vmem:[#allocation6 + $0xc] sm:$0xff]
    %v238 = vld [vmem:[#allocation6 + $0x14] sm:$0xf]
    %v239 = vld [vmem:[#allocation6 + $0x18] sm:$0xff]
    %v240 = vld [vmem:[#allocation6 + $0x20] sm:$0xf]
    %v241 = vld [vmem:[#allocation6 + $0x24] sm:$0xff]
    %v242 = vld [vmem:[#allocation6 + $0x2c] sm:$0xf]
    %v243 = vld [vmem:[#allocation6 + $0x30] sm:$0xff]
    %v244 = vld [vmem:[#allocation6 + $0x38] sm:$0xf]
    %v245 = vld [vmem:[#allocation6 + $0x3c] sm:$0xff]
    %v246 = vld [vmem:[#allocation6 + $0x44] sm:$0xf]
    %v247 = vld [vmem:[#allocation6 + $0x48] sm:$0xff]
    %v248 = vld [vmem:[#allocation6 + $0x50] sm:$0xf]
    %v249 = vld [vmem:[#allocation6 + $0x54] sm:$0xff]
    %v250 = vld [vmem:[#allocation6 + $0x5c] sm:$0xf]
    %v251 = vld [vmem:[#allocation6 + $0x60] sm:$0xff]
    %v252 = vld [vmem:[#allocation6 + $0x68] sm:$0xf]
    %v253 = vld [vmem:[#allocation6 + $0x6c] sm:$0xff]
    %v254 = vld [vmem:[#allocation6 + $0x74] sm:$0xf]
    %v255 = vld [vmem:[#allocation6 + $0x78] sm:$0xff]
    %v256 = vld [vmem:[#allocation6 + $0x80] sm:$0xf]
    %v257 = vld [vmem:[#allocation6 + $0x84] sm:$0xff]
    %v258 = vld [vmem:[#allocation6 + $0x8c] sm:$0xf]
    %v259 = vld [vmem:[#allocation6 + $0x90] sm:$0xff]
    %v260 = vld [vmem:[#allocation6 + $0x98] sm:$0xf]
    %v261 = vld [vmem:[#allocation6 + $0x9c] sm:$0xff]
    %v262 = vld [vmem:[#allocation6 + $0xa4] sm:$0xf]
    %v263 = vld [vmem:[#allocation6 + $0xa8] sm:$0xff]
    %v264 = vld [vmem:[#allocation6 + $0xb0] sm:$0xf]
    %v265 = vld [vmem:[#allocation6 + $0xb4] sm:$0xff]
    %v266 = vld [vmem:[#allocation6 + $0xbc] sm:$0xf]
    %v267 = vld [vmem:[#allocation6 + $0xc0] sm:$0xff]
    %v268 = vld [vmem:[#allocation6 + $0xc8] sm:$0xf]
    %v269 = vld [vmem:[#allocation6 + $0xcc] sm:$0xff]
    %v270 = vld [vmem:[#allocation6 + $0xd4] sm:$0xf]
    %v271 = vld [vmem:[#allocation6 + $0xd8] sm:$0xff]
    %v272 = vld [vmem:[#allocation6 + $0xe0] sm:$0xf]
    %v273 = vld [vmem:[#allocation6 + $0xe4] sm:$0xff]
    %v274 = vld [vmem:[#allocation6 + $0xec] sm:$0xf]
    %v275 = vld [vmem:[#allocation6 + $0xf0] sm:$0xff]
    %v276 = vld [vmem:[#allocation6 + $0xf8] sm:$0xf]
    %v277 = vld [vmem:[#allocation6 + $0xfc] sm:$0xff]
    %v278 = vld [vmem:[#allocation6 + $0x104] sm:$0xf]
    %v279 = vld [vmem:[#allocation6 + $0x108] sm:$0xff]
    %v280 = vld [vmem:[#allocation6 + $0x110] sm:$0xf]
    %v281 = vld [vmem:[#allocation6 + $0x114] sm:$0xff]
    %v282 = vld [vmem:[#allocation6 + $0x11c] sm:$0xf]
    %v283 = vld [vmem:[#allocation6 + $0x120] sm:$0xff]
    %v284 = vld [vmem:[#allocation6 + $0x128] sm:$0xf]
    %v285 = vld [vmem:[#allocation6 + $0x12c] sm:$0xff]
    %v286 = vld [vmem:[#allocation6 + $0x134] sm:$0xf]
    %v287 = vld [vmem:[#allocation6 + $0x138] sm:$0xff]
    %v288 = vld [vmem:[#allocation6 + $0x140] sm:$0xf]
    %v289 = vld [vmem:[#allocation6 + $0x144] sm:$0xff]
    %v290 = vld [vmem:[#allocation6 + $0x14c] sm:$0xf]
    %v291 = vld [vmem:[#allocation6 + $0x150] sm:$0xff]
    %v292 = vld [vmem:[#allocation6 + $0x158] sm:$0xf]
    %v293 = vld [vmem:[#allocation6 + $0x15c] sm:$0xff]
    %v294 = vld [vmem:[#allocation6 + $0x164] sm:$0xf]
    %v295 = vld [vmem:[#allocation6 + $0x168] sm:$0xff]
    %v296 = vld [vmem:[#allocation6 + $0x170] sm:$0xf]
    %v297 = vld [vmem:[#allocation6 + $0x174] sm:$0xff]
    %v298 = vld [vmem:[#allocation6 + $0x17c] sm:$0xf]
    %v299 = vld [vmem:[#allocation6 + $0x180] sm:$0xff]
    %v300 = vld [vmem:[#allocation6 + $0x188] sm:$0xf]
    %v301 = vld [vmem:[#allocation6 + $0x18c] sm:$0xff]
    %v302 = vld [vmem:[#allocation6 + $0x194] sm:$0xf]
    %v303 = vld [vmem:[#allocation6 + $0x198] sm:$0xff]
    %v304 = vld [vmem:[#allocation6 + $0x1a0] sm:$0xf]
    %v305 = vld [vmem:[#allocation6 + $0x1a4] sm:$0xff]
    %v306 = vld [vmem:[#allocation6 + $0x1ac] sm:$0xf]
    %v307 = vld [vmem:[#allocation6 + $0x1b0] sm:$0xff]
    %v308 = vld [vmem:[#allocation6 + $0x1b8] sm:$0xf]
    %v309 = vld [vmem:[#allocation6 + $0x1bc] sm:$0xff]
    %v310 = vld [vmem:[#allocation6 + $0x1c4] sm:$0xf]
    %v311 = vld [vmem:[#allocation6 + $0x1c8] sm:$0xff]
    %v312 = vld [vmem:[#allocation6 + $0x1d0] sm:$0xf]
    %v313 = vld [vmem:[#allocation6 + $0x1d4] sm:$0xff]
    %v314 = vld [vmem:[#allocation6 + $0x1dc] sm:$0xf]
    %v315 = vld [vmem:[#allocation6 + $0x1e0] sm:$0xff]
    %v316 = vld [vmem:[#allocation6 + $0x1e8] sm:$0xf]
    %v317 = vld [vmem:[#allocation6 + $0x1ec] sm:$0xff]
    %v318 = vld [vmem:[#allocation6 + $0x1f4] sm:$0xf]
    %v319 = vld [vmem:[#allocation6 + $0x1f8] sm:$0xff]
    %v320 = vld [vmem:[#allocation6 + $0x200] sm:$0xf]
    %v321 = vld [vmem:[#allocation6 + $0x204] sm:$0xff]
    %v322 = vld [vmem:[#allocation6 + $0x20c] sm:$0xf]
    %v323 = vld [vmem:[#allocation6 + $0x210] sm:$0xff]
    %v324 = vld [vmem:[#allocation6 + $0x218] sm:$0xf]
    %v325 = vld [vmem:[#allocation6 + $0x21c] sm:$0xff]
    %v326 = vld [vmem:[#allocation6 + $0x224] sm:$0xf]
    %v327 = vld [vmem:[#allocation6 + $0x228] sm:$0xff]
    %v328 = vld [vmem:[#allocation6 + $0x230] sm:$0xf]
    %v329 = vld [vmem:[#allocation6 + $0x234] sm:$0xff]
    %v330 = vld [vmem:[#allocation6 + $0x23c] sm:$0xf]
    %s331 = scalar_lea.vmem [#allocation7], 1
    %v332 = vld [vmem:[%s331] ss:$4 sm:$0x7]
    %v333 = vpack.c.bf16 %v232, %v229
    %v334 = vpack.c.bf16 %v233, %v230
    %v335 = vpack.c.bf16 %v234, %v231
    %v337 = vlaneseq
    %v338 = vshrl.u32 %v337, 7
    %v339 = vsub.s32 0, %v338
    %v340 = vrot.slane %v332, %v339
    %v341 = vlaneseq
    %v342 = vshrl.u32 %v341, 7
    %v343 = vsub.s32 1, %v342
    %v344 = vrot.slane %v332, %v343
    %v345 = vlaneseq
    %v346 = vshrl.u32 %v345, 7
    %v347 = vsub.s32 2, %v346
    %v348 = vrot.slane %v332, %v347
    %v448 = vunpack.c.l.b16 %v235
    %v449 = vunpack.c.h.b16 %v235
    %v450 = vunpack.c.l.b16 %v236
    %v451 = vunpack.c.l.b16 %v237
    %v452 = vunpack.c.h.b16 %v237
    %v453 = vunpack.c.l.b16 %v238
    %v454 = vunpack.c.l.b16 %v239
    %v455 = vunpack.c.h.b16 %v239
    %v456 = vunpack.c.l.b16 %v240
    %v457 = vunpack.c.l.b16 %v241
    %v458 = vunpack.c.h.b16 %v241
    %v459 = vunpack.c.l.b16 %v242
    %v460 = vunpack.c.l.b16 %v243
    %v461 = vunpack.c.h.b16 %v243
    %v462 = vunpack.c.l.b16 %v244
    %v463 = vunpack.c.l.b16 %v245
    %v464 = vunpack.c.h.b16 %v245
    %v465 = vunpack.c.l.b16 %v246
    %v466 = vunpack.c.l.b16 %v247
    %v467 = vunpack.c.h.b16 %v247
    %v468 = vunpack.c.l.b16 %v248
    %v469 = vunpack.c.l.b16 %v249
    %v470 = vunpack.c.h.b16 %v249
    %v471 = vunpack.c.l.b16 %v250
    %v472 = vunpack.c.l.b16 %v251
    %v473 = vunpack.c.h.b16 %v251
    %v474 = vunpack.c.l.b16 %v252
    %v475 = vunpack.c.l.b16 %v253
    %v476 = vunpack.c.h.b16 %v253
    %v477 = vunpack.c.l.b16 %v254
    %v478 = vunpack.c.l.b16 %v255
    %v479 = vunpack.c.h.b16 %v255
    %v480 = vunpack.c.l.b16 %v256
    %v481 = vunpack.c.l.b16 %v257
    %v482 = vunpack.c.h.b16 %v257
    %v483 = vunpack.c.l.b16 %v258
    %v484 = vunpack.c.l.b16 %v259
    %v485 = vunpack.c.h.b16 %v259
    %v486 = vunpack.c.l.b16 %v260
    %v487 = vunpack.c.l.b16 %v261
    %v488 = vunpack.c.h.b16 %v261
    %v489 = vunpack.c.l.b16 %v262
    %v490 = vunpack.c.l.b16 %v263
    %v491 = vunpack.c.h.b16 %v263
    %v492 = vunpack.c.l.b16 %v264
    %v493 = vunpack.c.l.b16 %v265
    %v494 = vunpack.c.h.b16 %v265
    %v495 = vunpack.c.l.b16 %v266
    %v496 = vunpack.c.l.b16 %v267
    %v497 = vunpack.c.h.b16 %v267
    %v498 = vunpack.c.l.b16 %v268
    %v499 = vunpack.c.l.b16 %v269
    %v500 = vunpack.c.h.b16 %v269
    %v501 = vunpack.c.l.b16 %v270
    %v502 = vunpack.c.l.b16 %v271
    %v503 = vunpack.c.h.b16 %v271
    %v504 = vunpack.c.l.b16 %v272
    %v505 = vunpack.c.l.b16 %v273
    %v506 = vunpack.c.h.b16 %v273
    %v507 = vunpack.c.l.b16 %v274
    %v508 = vunpack.c.l.b16 %v275
    %v509 = vunpack.c.h.b16 %v275
    %v510 = vunpack.c.l.b16 %v276
    %v511 = vunpack.c.l.b16 %v277
    %v512 = vunpack.c.h.b16 %v277
    %v513 = vunpack.c.l.b16 %v278
    %v514 = vunpack.c.l.b16 %v279
    %v515 = vunpack.c.h.b16 %v279
    %v516 = vunpack.c.l.b16 %v280
    %v517 = vunpack.c.l.b16 %v281
    %v518 = vunpack.c.h.b16 %v281
    %v519 = vunpack.c.l.b16 %v282
    %v520 = vunpack.c.l.b16 %v283
    %v521 = vunpack.c.h.b16 %v283
    %v522 = vunpack.c.l.b16 %v284
    %v523 = vunpack.c.l.b16 %v285
    %v524 = vunpack.c.h.b16 %v285
    %v525 = vunpack.c.l.b16 %v286
    %v526 = vunpack.c.l.b16 %v287
    %v527 = vunpack.c.h.b16 %v287
    %v528 = vunpack.c.l.b16 %v288
    %v529 = vunpack.c.l.b16 %v289
    %v530 = vunpack.c.h.b16 %v289
    %v531 = vunpack.c.l.b16 %v290
    %v532 = vunpack.c.l.b16 %v291
    %v533 = vunpack.c.h.b16 %v291
    %v534 = vunpack.c.l.b16 %v292
    %v535 = vunpack.c.l.b16 %v293
    %v536 = vunpack.c.h.b16 %v293
    %v537 = vunpack.c.l.b16 %v294
    %v538 = vunpack.c.l.b16 %v295
    %v539 = vunpack.c.h.b16 %v295
    %v540 = vunpack.c.l.b16 %v296
    %v541 = vunpack.c.l.b16 %v297
    %v542 = vunpack.c.h.b16 %v297
    %v543 = vunpack.c.l.b16 %v298
    %v544 = vunpack.c.l.b16 %v299
    %v545 = vunpack.c.h.b16 %v299
    %v546 = vunpack.c.l.b16 %v300
    %v547 = vunpack.c.l.b16 %v301
    %v548 = vunpack.c.h.b16 %v301
    %v549 = vunpack.c.l.b16 %v302
    %v550 = vunpack.c.l.b16 %v303
    %v551 = vunpack.c.h.b16 %v303
    %v552 = vunpack.c.l.b16 %v304
    %v553 = vunpack.c.l.b16 %v305
    %v554 = vunpack.c.h.b16 %v305
    %v555 = vunpack.c.l.b16 %v306
    %v556 = vunpack.c.l.b16 %v307
    %v557 = vunpack.c.h.b16 %v307
    %v558 = vunpack.c.l.b16 %v308
    %v559 = vunpack.c.l.b16 %v309
    %v560 = vunpack.c.h.b16 %v309
    %v561 = vunpack.c.l.b16 %v310
    %v562 = vunpack.c.l.b16 %v311
    %v563 = vunpack.c.h.b16 %v311
    %v564 = vunpack.c.l.b16 %v312
    %v565 = vunpack.c.l.b16 %v313
    %v566 = vunpack.c.h.b16 %v313
    %v567 = vunpack.c.l.b16 %v314
    %v568 = vunpack.c.l.b16 %v315
    %v569 = vunpack.c.h.b16 %v315
    %v570 = vunpack.c.l.b16 %v316
    %v571 = vunpack.c.l.b16 %v317
    %v572 = vunpack.c.h.b16 %v317
    %v573 = vunpack.c.l.b16 %v318
    %v574 = vunpack.c.l.b16 %v319
    %v575 = vunpack.c.h.b16 %v319
    %v576 = vunpack.c.l.b16 %v320
    %v577 = vunpack.c.l.b16 %v321
    %v578 = vunpack.c.h.b16 %v321
    %v579 = vunpack.c.l.b16 %v322
    %v580 = vunpack.c.l.b16 %v323
    %v581 = vunpack.c.h.b16 %v323
    %v582 = vunpack.c.l.b16 %v324
    %v583 = vunpack.c.l.b16 %v325
    %v584 = vunpack.c.h.b16 %v325
    %v585 = vunpack.c.l.b16 %v326
    %v586 = vunpack.c.l.b16 %v327
    %v587 = vunpack.c.h.b16 %v327
    %v588 = vunpack.c.l.b16 %v328
    %v589 = vunpack.c.l.b16 %v329
    %v590 = vunpack.c.h.b16 %v329
    %v591 = vunpack.c.l.b16 %v330
    %v592 = vpack.c.b16 %v451, %v448
    %v593 = vpack.c.b16 %v452, %v449
    %v594 = vpack.c.b16 %v453, %v450
    %v595 = vpack.c.b16 %v457, %v454
    %v596 = vpack.c.b16 %v458, %v455
    %v597 = vpack.c.b16 %v459, %v456
    %v598 = vpack.c.b16 %v463, %v460
    %v599 = vpack.c.b16 %v464, %v461
    %v600 = vpack.c.b16 %v465, %v462
    %v601 = vpack.c.b16 %v469, %v466
    %v602 = vpack.c.b16 %v470, %v467
    %v603 = vpack.c.b16 %v471, %v468
    %v604 = vpack.c.b16 %v475, %v472
    %v605 = vpack.c.b16 %v476, %v473
    %v606 = vpack.c.b16 %v477, %v474
    %v607 = vpack.c.b16 %v481, %v478
    %v608 = vpack.c.b16 %v482, %v479
    %v609 = vpack.c.b16 %v483, %v480
    %v610 = vpack.c.b16 %v487, %v484
    %v611 = vpack.c.b16 %v488, %v485
    %v612 = vpack.c.b16 %v489, %v486
    %v613 = vpack.c.b16 %v493, %v490
    %v614 = vpack.c.b16 %v494, %v491
    %v615 = vpack.c.b16 %v495, %v492
    %v616 = vpack.c.b16 %v499, %v496
    %v617 = vpack.c.b16 %v500, %v497
    %v618 = vpack.c.b16 %v501, %v498
    %v619 = vpack.c.b16 %v505, %v502
    %v620 = vpack.c.b16 %v506, %v503
    %v621 = vpack.c.b16 %v507, %v504
    %v622 = vpack.c.b16 %v511, %v508
    %v623 = vpack.c.b16 %v512, %v509
    %v624 = vpack.c.b16 %v513, %v510
    %v625 = vpack.c.b16 %v517, %v514
    %v626 = vpack.c.b16 %v518, %v515
    %v627 = vpack.c.b16 %v519, %v516
    %v628 = vpack.c.b16 %v523, %v520
    %v629 = vpack.c.b16 %v524, %v521
    %v630 = vpack.c.b16 %v525, %v522
    %v631 = vpack.c.b16 %v529, %v526
    %v632 = vpack.c.b16 %v530, %v527
    %v633 = vpack.c.b16 %v531, %v528
    %v634 = vpack.c.b16 %v535, %v532
    %v635 = vpack.c.b16 %v536, %v533
    %v636 = vpack.c.b16 %v537, %v534
    %v637 = vpack.c.b16 %v541, %v538
    %v638 = vpack.c.b16 %v542, %v539
    %v639 = vpack.c.b16 %v543, %v540
    %v640 = vpack.c.b16 %v547, %v544
    %v641 = vpack.c.b16 %v548, %v545
    %v642 = vpack.c.b16 %v549, %v546
    %v643 = vpack.c.b16 %v553, %v550
    %v644 = vpack.c.b16 %v554, %v551
    %v645 = vpack.c.b16 %v555, %v552
    %v646 = vpack.c.b16 %v559, %v556
    %v647 = vpack.c.b16 %v560, %v557
    %v648 = vpack.c.b16 %v561, %v558
    %v649 = vpack.c.b16 %v565, %v562
    %v650 = vpack.c.b16 %v566, %v563
    %v651 = vpack.c.b16 %v567, %v564
    %v652 = vpack.c.b16 %v571, %v568
    %v653 = vpack.c.b16 %v572, %v569
    %v654 = vpack.c.b16 %v573, %v570
    %v655 = vpack.c.b16 %v577, %v574
    %v656 = vpack.c.b16 %v578, %v575
    %v657 = vpack.c.b16 %v579, %v576
    %v658 = vpack.c.b16 %v583, %v580
    %v659 = vpack.c.b16 %v584, %v581
    %v660 = vpack.c.b16 %v585, %v582
    %v661 = vpack.c.b16 %v589, %v586
    %v662 = vpack.c.b16 %v590, %v587
    %v663 = vpack.c.b16 %v591, %v588
    %736 = vmatprep.subr.bf16.mxu0 %v614
    %737 = vmatpush1.bf16.msra.mxu0 %v613
    %738 = vmatprep.subr.bf16.mxu0 %v611
    %739 = vmatpush1.bf16.msra.mxu0 %v610
    %740 = vmatprep.subr.bf16.mxu0 %v608
    %741 = vmatpush1.bf16.msra.mxu0 %v607
    %742 = vmatprep.subr.bf16.mxu0 %v605
    %743 = vmatpush1.bf16.msra.mxu0 %v604
    %744 = vmatprep.subr.bf16.mxu0 %v602
    %745 = vmatpush1.bf16.msra.mxu0 %v601
    %746 = vmatprep.subr.bf16.mxu0 %v599
    %747 = vmatpush1.bf16.msra.mxu0 %v598
    %748 = vmatprep.subr.bf16.mxu0 %v596
    %749 = vmatpush1.bf16.msra.mxu0 %v595
    %750 = vmatprep.subr.bf16.mxu0 %v593
    %751 = vmatpush1.bf16.msra.mxu0 %v592
    %752 = vmatprep.subr.bf16.mxu0 %v638
    %753 = vmatpush2.bf16.msra.mxu0 %v637
    %754 = vmatprep.subr.bf16.mxu0 %v635
    %755 = vmatpush2.bf16.msra.mxu0 %v634
    %756 = vmatprep.subr.bf16.mxu0 %v632
    %757 = vmatpush2.bf16.msra.mxu0 %v631
    %758 = vmatprep.subr.bf16.mxu0 %v629
    %759 = vmatpush2.bf16.msra.mxu0 %v628
    %760 = vmatprep.subr.bf16.mxu0 %v626
    %761 = vmatpush2.bf16.msra.mxu0 %v625
    %762 = vmatprep.subr.bf16.mxu0 %v623
    %763 = vmatpush2.bf16.msra.mxu0 %v622
    %764 = vmatprep.subr.bf16.mxu0 %v620
    %765 = vmatpush2.bf16.msra.mxu0 %v619
    %766 = vmatprep.subr.bf16.mxu0 %v617
    %767 = vmatpush2.bf16.msra.mxu0 %v616
    %768 = vmatprep.mubr.bf16.mxu0 %v334
    %769 = vmatmul.mubr.bf16.gmra.mxu0 %v333
    %v770 = vpop.f32.mrf.mxu0
    %v771 = vadd.f32 %v340, %v770
    %v772 = vpop.f32.mrf.mxu0
    %v773 = vadd.f32 %v344, %v772
    %v774 = vpop.f32.mrf.mxu0
    %v775 = vadd.f32 %v340, %v774
    %v776 = vpop.f32.mrf.mxu0
    %v777 = vadd.f32 %v344, %v776
    %778 = vdwg.mxu0
    %779 = vmatprep.subr.bf16.mxu0 %v662
    %780 = vmatpush1.bf16.msra.mxu0 %v661
    %781 = vmatprep.subr.bf16.mxu0 %v659
    %782 = vmatpush1.bf16.msra.mxu0 %v658
    %783 = vmatprep.subr.bf16.mxu0 %v656
    %784 = vmatpush1.bf16.msra.mxu0 %v655
    %785 = vmatprep.subr.bf16.mxu0 %v653
    %786 = vmatpush1.bf16.msra.mxu0 %v652
    %787 = vmatprep.subr.bf16.mxu0 %v650
    %788 = vmatpush1.bf16.msra.mxu0 %v649
    %789 = vmatprep.subr.bf16.mxu0 %v647
    %790 = vmatpush1.bf16.msra.mxu0 %v646
    %791 = vmatprep.subr.bf16.mxu0 %v644
    %792 = vmatpush1.bf16.msra.mxu0 %v643
    %793 = vmatprep.subr.bf16.mxu0 %v641
    %794 = vmatpush1.bf16.msra.mxu0 %v640
    %795 = vmatprep.subr.bf16.mxu0 0
    %796 = vmatpush2.bf16.msra.mxu0 0
    %797 = vmatprep.subr.bf16.mxu0 0
    %798 = vmatpush2.bf16.msra.mxu0 0
    %799 = vmatprep.subr.bf16.mxu0 0
    %800 = vmatpush2.bf16.msra.mxu0 0
    %801 = vmatprep.subr.bf16.mxu0 0
    %802 = vmatpush2.bf16.msra.mxu0 0
    %803 = vmatprep.subr.bf16.mxu0 0
    %804 = vmatpush2.bf16.msra.mxu0 0
    %805 = vmatprep.subr.bf16.mxu0 0
    %806 = vmatpush2.bf16.msra.mxu0 0
    %807 = vmatprep.subr.bf16.mxu0 0
    %808 = vmatpush2.bf16.msra.mxu0 0
    %809 = vmatprep.subr.bf16.mxu0 0
    %810 = vmatpush2.bf16.msra.mxu0 0
    %811 = vmatprep.mubr.bf16.mxu0 0
    %812 = vmatmul.mubr.bf16.gmra.mxu0 %v335
    %v813 = vpop.f32.mrf.mxu0
    %v814 = vadd.f32 %v771, %v813
    %v815 = vpop.f32.mrf.mxu0
    %v816 = vadd.f32 %v773, %v815
    %v817 = vpop.f32.mrf.mxu0
    %v818 = vadd.f32 %v775, %v817
    %v819 = vpop.f32.mrf.mxu0
    %v820 = vadd.f32 %v777, %v819
    %821 = vdwg.mxu0
    %822 = vmatprep.subr.bf16.mxu0 0
    %823 = vmatpush1.bf16.msra.mxu0 %v615
    %824 = vmatprep.subr.bf16.mxu0 0
    %825 = vmatpush1.bf16.msra.mxu0 %v612
    %826 = vmatprep.subr.bf16.mxu0 0
    %827 = vmatpush1.bf16.msra.mxu0 %v609
    %828 = vmatprep.subr.bf16.mxu0 0
    %829 = vmatpush1.bf16.msra.mxu0 %v606
    %830 = vmatprep.subr.bf16.mxu0 0
    %831 = vmatpush1.bf16.msra.mxu0 %v603
    %832 = vmatprep.subr.bf16.mxu0 0
    %833 = vmatpush1.bf16.msra.mxu0 %v600
    %834 = vmatprep.subr.bf16.mxu0 0
    %835 = vmatpush1.bf16.msra.mxu0 %v597
    %836 = vmatprep.subr.bf16.mxu0 0
    %837 = vmatpush1.bf16.msra.mxu0 %v594
    %838 = vmatprep.subr.bf16.mxu0 0
    %839 = vmatpush2.bf16.msra.mxu0 %v639
    %840 = vmatprep.subr.bf16.mxu0 0
    %841 = vmatpush2.bf16.msra.mxu0 %v636
    %842 = vmatprep.subr.bf16.mxu0 0
    %843 = vmatpush2.bf16.msra.mxu0 %v633
    %844 = vmatprep.subr.bf16.mxu0 0
    %845 = vmatpush2.bf16.msra.mxu0 %v630
    %846 = vmatprep.subr.bf16.mxu0 0
    %847 = vmatpush2.bf16.msra.mxu0 %v627
    %848 = vmatprep.subr.bf16.mxu0 0
    %849 = vmatpush2.bf16.msra.mxu0 %v624
    %850 = vmatprep.subr.bf16.mxu0 0
    %851 = vmatpush2.bf16.msra.mxu0 %v621
    %852 = vmatprep.subr.bf16.mxu0 0
    %853 = vmatpush2.bf16.msra.mxu0 %v618
    %854 = vmatprep.mubr.bf16.mxu0 %v334
    %855 = vmatmul.mubr.bf16.gmra.mxu0 %v333
    %v856 = vpop.f32.mrf.mxu0
    %v857 = vadd.f32 %v348, %v856
    %v858 = vpop.f32.mrf.mxu0
    %v859 = vpop.f32.mrf.mxu0
    %v860 = vadd.f32 %v348, %v859
    %v861 = vpop.f32.mrf.mxu0
    %862 = vdwg.mxu0
    %863 = vmatprep.subr.bf16.mxu0 0
    %864 = vmatpush1.bf16.msra.mxu0 %v663
    %865 = vmatprep.subr.bf16.mxu0 0
    %866 = vmatpush1.bf16.msra.mxu0 %v660
    %867 = vmatprep.subr.bf16.mxu0 0
    %868 = vmatpush1.bf16.msra.mxu0 %v657
    %869 = vmatprep.subr.bf16.mxu0 0
    %870 = vmatpush1.bf16.msra.mxu0 %v654
    %871 = vmatprep.subr.bf16.mxu0 0
    %872 = vmatpush1.bf16.msra.mxu0 %v651
    %873 = vmatprep.subr.bf16.mxu0 0
    %874 = vmatpush1.bf16.msra.mxu0 %v648
    %875 = vmatprep.subr.bf16.mxu0 0
    %876 = vmatpush1.bf16.msra.mxu0 %v645
    %877 = vmatprep.subr.bf16.mxu0 0
    %878 = vmatpush1.bf16.msra.mxu0 %v642
    %879 = vmatprep.subr.bf16.mxu0 0
    %880 = vmatpush2.bf16.msra.mxu0 0
    %881 = vmatprep.subr.bf16.mxu0 0
    %882 = vmatpush2.bf16.msra.mxu0 0
    %883 = vmatprep.subr.bf16.mxu0 0
    %884 = vmatpush2.bf16.msra.mxu0 0
    %885 = vmatprep.subr.bf16.mxu0 0
    %886 = vmatpush2.bf16.msra.mxu0 0
    %887 = vmatprep.subr.bf16.mxu0 0
    %888 = vmatpush2.bf16.msra.mxu0 0
    %889 = vmatprep.subr.bf16.mxu0 0
    %890 = vmatpush2.bf16.msra.mxu0 0
    %891 = vmatprep.subr.bf16.mxu0 0
    %892 = vmatpush2.bf16.msra.mxu0 0
    %893 = vmatprep.subr.bf16.mxu0 0
    %894 = vmatpush2.bf16.msra.mxu0 0
    %895 = vmatprep.mubr.bf16.mxu0 0
    %896 = vmatmul.mubr.bf16.gmra.mxu0 %v335
    %v897 = vpop.f32.mrf.mxu0
    %v898 = vadd.f32 %v857, %v897
    %v899 = vpop.f32.mrf.mxu0
    %v900 = vpop.f32.mrf.mxu0
    %v901 = vadd.f32 %v860, %v900
    %v902 = vpop.f32.mrf.mxu0
    %903 = vdwg.mxu0
    %v904 = vsub.f32 0.0, %v814
    %v905 = vsub.f32 0.0, %v816
    %v906 = vsub.f32 0.0, %v898
    %v907 = vsub.f32 0.0, %v818
    %v908 = vsub.f32 0.0, %v820
    %v909 = vsub.f32 0.0, %v901
    %v910 = vmul.f32 %v904, 1.442695
    %v911 = vpow.pop %v910
    %v912 = vmul.f32 %v905, 1.442695
    %v913 = vpow.pop %v912
    %v914 = vmul.f32 %v906, 1.442695
    %v915 = vpow.pop %v914
    %v916 = vmul.f32 %v907, 1.442695
    %v917 = vpow.pop %v916
    %v918 = vmul.f32 %v908, 1.442695
    %v919 = vpow.pop %v918
    %v920 = vmul.f32 %v909, 1.442695
    %v921 = vpow.pop %v920
    %v922 = vadd.f32 %v911, 1.0
    %v923 = vadd.f32 %v913, 1.0
    %v924 = vadd.f32 %v915, 1.0
    %v925 = vadd.f32 %v917, 1.0
    %v926 = vadd.f32 %v919, 1.0
    %v927 = vadd.f32 %v921, 1.0
    %v928 = vrcp.pop %v922
    %v929 = vrcp.pop %v923
    %v930 = vrcp.pop %v924
    %v931 = vrcp.pop %v925
    %v932 = vrcp.pop %v926
    %v933 = vrcp.pop %v927
    %v934 = vmul.f32 %v814, %v928
    %v935 = vmul.f32 %v816, %v929
    %v936 = vmul.f32 %v898, %v930
    %v937 = vmul.f32 %v818, %v931
    %v938 = vmul.f32 %v820, %v932
    %v939 = vmul.f32 %v901, %v933
    %s940 = scalar_lea.vmem [#allocation6], 576
    %v941 = vld [vmem:[%s940] sm:$0xff]
    %v942 = vld [vmem:[%s940 + $0x8] sm:$0xf]
    %v943 = vld [vmem:[%s940 + $0xc] sm:$0xff]
    %v944 = vld [vmem:[%s940 + $0x14] sm:$0xf]
    %v945 = vld [vmem:[%s940 + $0x18] sm:$0xff]
    %v946 = vld [vmem:[%s940 + $0x20] sm:$0xf]
    %v947 = vld [vmem:[%s940 + $0x24] sm:$0xff]
    %v948 = vld [vmem:[%s940 + $0x2c] sm:$0xf]
    %v949 = vld [vmem:[%s940 + $0x30] sm:$0xff]
    %v950 = vld [vmem:[%s940 + $0x38] sm:$0xf]
    %v951 = vld [vmem:[%s940 + $0x3c] sm:$0xff]
    %v952 = vld [vmem:[%s940 + $0x44] sm:$0xf]
    %v953 = vld [vmem:[%s940 + $0x48] sm:$0xff]
    %v954 = vld [vmem:[%s940 + $0x50] sm:$0xf]
    %v955 = vld [vmem:[%s940 + $0x54] sm:$0xff]
    %v956 = vld [vmem:[%s940 + $0x5c] sm:$0xf]
    %v957 = vld [vmem:[%s940 + $0x60] sm:$0xff]
    %v958 = vld [vmem:[%s940 + $0x68] sm:$0xf]
    %v959 = vld [vmem:[%s940 + $0x6c] sm:$0xff]
    %v960 = vld [vmem:[%s940 + $0x74] sm:$0xf]
    %v961 = vld [vmem:[%s940 + $0x78] sm:$0xff]
    %v962 = vld [vmem:[%s940 + $0x80] sm:$0xf]
    %v963 = vld [vmem:[%s940 + $0x84] sm:$0xff]
    %v964 = vld [vmem:[%s940 + $0x8c] sm:$0xf]
    %v965 = vld [vmem:[%s940 + $0x90] sm:$0xff]
    %v966 = vld [vmem:[%s940 + $0x98] sm:$0xf]
    %v967 = vld [vmem:[%s940 + $0x9c] sm:$0xff]
    %v968 = vld [vmem:[%s940 + $0xa4] sm:$0xf]
    %v969 = vld [vmem:[%s940 + $0xa8] sm:$0xff]
    %v970 = vld [vmem:[%s940 + $0xb0] sm:$0xf]
    %v971 = vld [vmem:[%s940 + $0xb4] sm:$0xff]
    %v972 = vld [vmem:[%s940 + $0xbc] sm:$0xf]
    %v973 = vld [vmem:[%s940 + $0xc0] sm:$0xff]
    %v974 = vld [vmem:[%s940 + $0xc8] sm:$0xf]
    %v975 = vld [vmem:[%s940 + $0xcc] sm:$0xff]
    %v976 = vld [vmem:[%s940 + $0xd4] sm:$0xf]
    %v977 = vld [vmem:[%s940 + $0xd8] sm:$0xff]
    %v978 = vld [vmem:[%s940 + $0xe0] sm:$0xf]
    %v979 = vld [vmem:[%s940 + $0xe4] sm:$0xff]
    %v980 = vld [vmem:[%s940 + $0xec] sm:$0xf]
    %v981 = vld [vmem:[%s940 + $0xf0] sm:$0xff]
    %v982 = vld [vmem:[%s940 + $0xf8] sm:$0xf]
    %v983 = vld [vmem:[%s940 + $0xfc] sm:$0xff]
    %v984 = vld [vmem:[%s940 + $0x104] sm:$0xf]
    %v985 = vld [vmem:[%s940 + $0x108] sm:$0xff]
    %v986 = vld [vmem:[%s940 + $0x110] sm:$0xf]
    %v987 = vld [vmem:[%s940 + $0x114] sm:$0xff]
    %v988 = vld [vmem:[%s940 + $0x11c] sm:$0xf]
    %v989 = vld [vmem:[%s940 + $0x120] sm:$0xff]
    %v990 = vld [vmem:[%s940 + $0x128] sm:$0xf]
    %v991 = vld [vmem:[%s940 + $0x12c] sm:$0xff]
    %v992 = vld [vmem:[%s940 + $0x134] sm:$0xf]
    %v993 = vld [vmem:[%s940 + $0x138] sm:$0xff]
    %v994 = vld [vmem:[%s940 + $0x140] sm:$0xf]
    %v995 = vld [vmem:[%s940 + $0x144] sm:$0xff]
    %v996 = vld [vmem:[%s940 + $0x14c] sm:$0xf]
    %v997 = vld [vmem:[%s940 + $0x150] sm:$0xff]
    %v998 = vld [vmem:[%s940 + $0x158] sm:$0xf]
    %v999 = vld [vmem:[%s940 + $0x15c] sm:$0xff]
    %v1000 = vld [vmem:[%s940 + $0x164] sm:$0xf]
    %v1001 = vld [vmem:[%s940 + $0x168] sm:$0xff]
    %v1002 = vld [vmem:[%s940 + $0x170] sm:$0xf]
    %v1003 = vld [vmem:[%s940 + $0x174] sm:$0xff]
    %v1004 = vld [vmem:[%s940 + $0x17c] sm:$0xf]
    %v1005 = vld [vmem:[%s940 + $0x180] sm:$0xff]
    %v1006 = vld [vmem:[%s940 + $0x188] sm:$0xf]
    %v1007 = vld [vmem:[%s940 + $0x18c] sm:$0xff]
    %v1008 = vld [vmem:[%s940 + $0x194] sm:$0xf]
    %v1009 = vld [vmem:[%s940 + $0x198] sm:$0xff]
    %v1010 = vld [vmem:[%s940 + $0x1a0] sm:$0xf]
    %v1011 = vld [vmem:[%s940 + $0x1a4] sm:$0xff]
    %v1012 = vld [vmem:[%s940 + $0x1ac] sm:$0xf]
    %v1013 = vld [vmem:[%s940 + $0x1b0] sm:$0xff]
    %v1014 = vld [vmem:[%s940 + $0x1b8] sm:$0xf]
    %v1015 = vld [vmem:[%s940 + $0x1bc] sm:$0xff]
    %v1016 = vld [vmem:[%s940 + $0x1c4] sm:$0xf]
    %v1017 = vld [vmem:[%s940 + $0x1c8] sm:$0xff]
    %v1018 = vld [vmem:[%s940 + $0x1d0] sm:$0xf]
    %v1019 = vld [vmem:[%s940 + $0x1d4] sm:$0xff]
    %v1020 = vld [vmem:[%s940 + $0x1dc] sm:$0xf]
    %v1021 = vld [vmem:[%s940 + $0x1e0] sm:$0xff]
    %v1022 = vld [vmem:[%s940 + $0x1e8] sm:$0xf]
    %v1023 = vld [vmem:[%s940 + $0x1ec] sm:$0xff]
    %v1024 = vld [vmem:[%s940 + $0x1f4] sm:$0xf]
    %v1025 = vld [vmem:[%s940 + $0x1f8] sm:$0xff]
    %v1026 = vld [vmem:[%s940 + $0x200] sm:$0xf]
    %v1027 = vld [vmem:[%s940 + $0x204] sm:$0xff]
    %v1028 = vld [vmem:[%s940 + $0x20c] sm:$0xf]
    %v1029 = vld [vmem:[%s940 + $0x210] sm:$0xff]
    %v1030 = vld [vmem:[%s940 + $0x218] sm:$0xf]
    %v1031 = vld [vmem:[%s940 + $0x21c] sm:$0xff]
    %v1032 = vld [vmem:[%s940 + $0x224] sm:$0xf]
    %v1033 = vld [vmem:[%s940 + $0x228] sm:$0xff]
    %v1034 = vld [vmem:[%s940 + $0x230] sm:$0xf]
    %v1035 = vld [vmem:[%s940 + $0x234] sm:$0xff]
    %v1036 = vld [vmem:[%s940 + $0x23c] sm:$0xf]
    %s1037 = scalar_lea.vmem [#allocation7], 2
    %v1038 = vld [vmem:[%s1037] ss:$4 sm:$0x7]
    %v1039 = vpack.c.bf16 %v937, %v934
    %v1040 = vpack.c.bf16 %v938, %v935
    %v1041 = vpack.c.bf16 %v939, %v936
    %v1043 = vlaneseq
    %v1044 = vshrl.u32 %v1043, 7
    %v1045 = vsub.s32 0, %v1044
    %v1046 = vrot.slane %v1038, %v1045
    %v1047 = vlaneseq
    %v1048 = vshrl.u32 %v1047, 7
    %v1049 = vsub.s32 1, %v1048
    %v1050 = vrot.slane %v1038, %v1049
    %v1051 = vlaneseq
    %v1052 = vshrl.u32 %v1051, 7
    %v1053 = vsub.s32 2, %v1052
    %v1054 = vrot.slane %v1038, %v1053
    %v1154 = vunpack.c.l.b16 %v941
    %v1155 = vunpack.c.h.b16 %v941
    %v1156 = vunpack.c.l.b16 %v942
    %v1157 = vunpack.c.l.b16 %v943
    %v1158 = vunpack.c.h.b16 %v943
    %v1159 = vunpack.c.l.b16 %v944
    %v1160 = vunpack.c.l.b16 %v945
    %v1161 = vunpack.c.h.b16 %v945
    %v1162 = vunpack.c.l.b16 %v946
    %v1163 = vunpack.c.l.b16 %v947
    %v1164 = vunpack.c.h.b16 %v947
    %v1165 = vunpack.c.l.b16 %v948
    %v1166 = vunpack.c.l.b16 %v949
    %v1167 = vunpack.c.h.b16 %v949
    %v1168 = vunpack.c.l.b16 %v950
    %v1169 = vunpack.c.l.b16 %v951
    %v1170 = vunpack.c.h.b16 %v951
    %v1171 = vunpack.c.l.b16 %v952
    %v1172 = vunpack.c.l.b16 %v953
    %v1173 = vunpack.c.h.b16 %v953
    %v1174 = vunpack.c.l.b16 %v954
    %v1175 = vunpack.c.l.b16 %v955
    %v1176 = vunpack.c.h.b16 %v955
    %v1177 = vunpack.c.l.b16 %v956
    %v1178 = vunpack.c.l.b16 %v957
    %v1179 = vunpack.c.h.b16 %v957
    %v1180 = vunpack.c.l.b16 %v958
    %v1181 = vunpack.c.l.b16 %v959
    %v1182 = vunpack.c.h.b16 %v959
    %v1183 = vunpack.c.l.b16 %v960
    %v1184 = vunpack.c.l.b16 %v961
    %v1185 = vunpack.c.h.b16 %v961
    %v1186 = vunpack.c.l.b16 %v962
    %v1187 = vunpack.c.l.b16 %v963
    %v1188 = vunpack.c.h.b16 %v963
    %v1189 = vunpack.c.l.b16 %v964
    %v1190 = vunpack.c.l.b16 %v965
    %v1191 = vunpack.c.h.b16 %v965
    %v1192 = vunpack.c.l.b16 %v966
    %v1193 = vunpack.c.l.b16 %v967
    %v1194 = vunpack.c.h.b16 %v967
    %v1195 = vunpack.c.l.b16 %v968
    %v1196 = vunpack.c.l.b16 %v969
    %v1197 = vunpack.c.h.b16 %v969
    %v1198 = vunpack.c.l.b16 %v970
    %v1199 = vunpack.c.l.b16 %v971
    %v1200 = vunpack.c.h.b16 %v971
    %v1201 = vunpack.c.l.b16 %v972
    %v1202 = vunpack.c.l.b16 %v973
    %v1203 = vunpack.c.h.b16 %v973
    %v1204 = vunpack.c.l.b16 %v974
    %v1205 = vunpack.c.l.b16 %v975
    %v1206 = vunpack.c.h.b16 %v975
    %v1207 = vunpack.c.l.b16 %v976
    %v1208 = vunpack.c.l.b16 %v977
    %v1209 = vunpack.c.h.b16 %v977
    %v1210 = vunpack.c.l.b16 %v978
    %v1211 = vunpack.c.l.b16 %v979
    %v1212 = vunpack.c.h.b16 %v979
    %v1213 = vunpack.c.l.b16 %v980
    %v1214 = vunpack.c.l.b16 %v981
    %v1215 = vunpack.c.h.b16 %v981
    %v1216 = vunpack.c.l.b16 %v982
    %v1217 = vunpack.c.l.b16 %v983
    %v1218 = vunpack.c.h.b16 %v983
    %v1219 = vunpack.c.l.b16 %v984
    %v1220 = vunpack.c.l.b16 %v985
    %v1221 = vunpack.c.h.b16 %v985
    %v1222 = vunpack.c.l.b16 %v986
    %v1223 = vunpack.c.l.b16 %v987
    %v1224 = vunpack.c.h.b16 %v987
    %v1225 = vunpack.c.l.b16 %v988
    %v1226 = vunpack.c.l.b16 %v989
    %v1227 = vunpack.c.h.b16 %v989
    %v1228 = vunpack.c.l.b16 %v990
    %v1229 = vunpack.c.l.b16 %v991
    %v1230 = vunpack.c.h.b16 %v991
    %v1231 = vunpack.c.l.b16 %v992
    %v1232 = vunpack.c.l.b16 %v993
    %v1233 = vunpack.c.h.b16 %v993
    %v1234 = vunpack.c.l.b16 %v994
    %v1235 = vunpack.c.l.b16 %v995
    %v1236 = vunpack.c.h.b16 %v995
    %v1237 = vunpack.c.l.b16 %v996
    %v1238 = vunpack.c.l.b16 %v997
    %v1239 = vunpack.c.h.b16 %v997
    %v1240 = vunpack.c.l.b16 %v998
    %v1241 = vunpack.c.l.b16 %v999
    %v1242 = vunpack.c.h.b16 %v999
    %v1243 = vunpack.c.l.b16 %v1000
    %v1244 = vunpack.c.l.b16 %v1001
    %v1245 = vunpack.c.h.b16 %v1001
    %v1246 = vunpack.c.l.b16 %v1002
    %v1247 = vunpack.c.l.b16 %v1003
    %v1248 = vunpack.c.h.b16 %v1003
    %v1249 = vunpack.c.l.b16 %v1004
    %v1250 = vunpack.c.l.b16 %v1005
    %v1251 = vunpack.c.h.b16 %v1005
    %v1252 = vunpack.c.l.b16 %v1006
    %v1253 = vunpack.c.l.b16 %v1007
    %v1254 = vunpack.c.h.b16 %v1007
    %v1255 = vunpack.c.l.b16 %v1008
    %v1256 = vunpack.c.l.b16 %v1009
    %v1257 = vunpack.c.h.b16 %v1009
    %v1258 = vunpack.c.l.b16 %v1010
    %v1259 = vunpack.c.l.b16 %v1011
    %v1260 = vunpack.c.h.b16 %v1011
    %v1261 = vunpack.c.l.b16 %v1012
    %v1262 = vunpack.c.l.b16 %v1013
    %v1263 = vunpack.c.h.b16 %v1013
    %v1264 = vunpack.c.l.b16 %v1014
    %v1265 = vunpack.c.l.b16 %v1015
    %v1266 = vunpack.c.h.b16 %v1015
    %v1267 = vunpack.c.l.b16 %v1016
    %v1268 = vunpack.c.l.b16 %v1017
    %v1269 = vunpack.c.h.b16 %v1017
    %v1270 = vunpack.c.l.b16 %v1018
    %v1271 = vunpack.c.l.b16 %v1019
    %v1272 = vunpack.c.h.b16 %v1019
    %v1273 = vunpack.c.l.b16 %v1020
    %v1274 = vunpack.c.l.b16 %v1021
    %v1275 = vunpack.c.h.b16 %v1021
    %v1276 = vunpack.c.l.b16 %v1022
    %v1277 = vunpack.c.l.b16 %v1023
    %v1278 = vunpack.c.h.b16 %v1023
    %v1279 = vunpack.c.l.b16 %v1024
    %v1280 = vunpack.c.l.b16 %v1025
    %v1281 = vunpack.c.h.b16 %v1025
    %v1282 = vunpack.c.l.b16 %v1026
    %v1283 = vunpack.c.l.b16 %v1027
    %v1284 = vunpack.c.h.b16 %v1027
    %v1285 = vunpack.c.l.b16 %v1028
    %v1286 = vunpack.c.l.b16 %v1029
    %v1287 = vunpack.c.h.b16 %v1029
    %v1288 = vunpack.c.l.b16 %v1030
    %v1289 = vunpack.c.l.b16 %v1031
    %v1290 = vunpack.c.h.b16 %v1031
    %v1291 = vunpack.c.l.b16 %v1032
    %v1292 = vunpack.c.l.b16 %v1033
    %v1293 = vunpack.c.h.b16 %v1033
    %v1294 = vunpack.c.l.b16 %v1034
    %v1295 = vunpack.c.l.b16 %v1035
    %v1296 = vunpack.c.h.b16 %v1035
    %v1297 = vunpack.c.l.b16 %v1036
    %v1298 = vpack.c.b16 %v1157, %v1154
    %v1299 = vpack.c.b16 %v1158, %v1155
    %v1300 = vpack.c.b16 %v1159, %v1156
    %v1301 = vpack.c.b16 %v1163, %v1160
    %v1302 = vpack.c.b16 %v1164, %v1161
    %v1303 = vpack.c.b16 %v1165, %v1162
    %v1304 = vpack.c.b16 %v1169, %v1166
    %v1305 = vpack.c.b16 %v1170, %v1167
    %v1306 = vpack.c.b16 %v1171, %v1168
    %v1307 = vpack.c.b16 %v1175, %v1172
    %v1308 = vpack.c.b16 %v1176, %v1173
    %v1309 = vpack.c.b16 %v1177, %v1174
    %v1310 = vpack.c.b16 %v1181, %v1178
    %v1311 = vpack.c.b16 %v1182, %v1179
    %v1312 = vpack.c.b16 %v1183, %v1180
    %v1313 = vpack.c.b16 %v1187, %v1184
    %v1314 = vpack.c.b16 %v1188, %v1185
    %v1315 = vpack.c.b16 %v1189, %v1186
    %v1316 = vpack.c.b16 %v1193, %v1190
    %v1317 = vpack.c.b16 %v1194, %v1191
    %v1318 = vpack.c.b16 %v1195, %v1192
    %v1319 = vpack.c.b16 %v1199, %v1196
    %v1320 = vpack.c.b16 %v1200, %v1197
    %v1321 = vpack.c.b16 %v1201, %v1198
    %v1322 = vpack.c.b16 %v1205, %v1202
    %v1323 = vpack.c.b16 %v1206, %v1203
    %v1324 = vpack.c.b16 %v1207, %v1204
    %v1325 = vpack.c.b16 %v1211, %v1208
    %v1326 = vpack.c.b16 %v1212, %v1209
    %v1327 = vpack.c.b16 %v1213, %v1210
    %v1328 = vpack.c.b16 %v1217, %v1214
    %v1329 = vpack.c.b16 %v1218, %v1215
    %v1330 = vpack.c.b16 %v1219, %v1216
    %v1331 = vpack.c.b16 %v1223, %v1220
    %v1332 = vpack.c.b16 %v1224, %v1221
    %v1333 = vpack.c.b16 %v1225, %v1222
    %v1334 = vpack.c.b16 %v1229, %v1226
    %v1335 = vpack.c.b16 %v1230, %v1227
    %v1336 = vpack.c.b16 %v1231, %v1228
    %v1337 = vpack.c.b16 %v1235, %v1232
    %v1338 = vpack.c.b16 %v1236, %v1233
    %v1339 = vpack.c.b16 %v1237, %v1234
    %v1340 = vpack.c.b16 %v1241, %v1238
    %v1341 = vpack.c.b16 %v1242, %v1239
    %v1342 = vpack.c.b16 %v1243, %v1240
    %v1343 = vpack.c.b16 %v1247, %v1244
    %v1344 = vpack.c.b16 %v1248, %v1245
    %v1345 = vpack.c.b16 %v1249, %v1246
    %v1346 = vpack.c.b16 %v1253, %v1250
    %v1347 = vpack.c.b16 %v1254, %v1251
    %v1348 = vpack.c.b16 %v1255, %v1252
    %v1349 = vpack.c.b16 %v1259, %v1256
    %v1350 = vpack.c.b16 %v1260, %v1257
    %v1351 = vpack.c.b16 %v1261, %v1258
    %v1352 = vpack.c.b16 %v1265, %v1262
    %v1353 = vpack.c.b16 %v1266, %v1263
    %v1354 = vpack.c.b16 %v1267, %v1264
    %v1355 = vpack.c.b16 %v1271, %v1268
    %v1356 = vpack.c.b16 %v1272, %v1269
    %v1357 = vpack.c.b16 %v1273, %v1270
    %v1358 = vpack.c.b16 %v1277, %v1274
    %v1359 = vpack.c.b16 %v1278, %v1275
    %v1360 = vpack.c.b16 %v1279, %v1276
    %v1361 = vpack.c.b16 %v1283, %v1280
    %v1362 = vpack.c.b16 %v1284, %v1281
    %v1363 = vpack.c.b16 %v1285, %v1282
    %v1364 = vpack.c.b16 %v1289, %v1286
    %v1365 = vpack.c.b16 %v1290, %v1287
    %v1366 = vpack.c.b16 %v1291, %v1288
    %v1367 = vpack.c.b16 %v1295, %v1292
    %v1368 = vpack.c.b16 %v1296, %v1293
    %v1369 = vpack.c.b16 %v1297, %v1294
    %1442 = vmatprep.subr.bf16.mxu0 %v1320
    %1443 = vmatpush1.bf16.msra.mxu0 %v1319
    %1444 = vmatprep.subr.bf16.mxu0 %v1317
    %1445 = vmatpush1.bf16.msra.mxu0 %v1316
    %1446 = vmatprep.subr.bf16.mxu0 %v1314
    %1447 = vmatpush1.bf16.msra.mxu0 %v1313
    %1448 = vmatprep.subr.bf16.mxu0 %v1311
    %1449 = vmatpush1.bf16.msra.mxu0 %v1310
    %1450 = vmatprep.subr.bf16.mxu0 %v1308
    %1451 = vmatpush1.bf16.msra.mxu0 %v1307
    %1452 = vmatprep.subr.bf16.mxu0 %v1305
    %1453 = vmatpush1.bf16.msra.mxu0 %v1304
    %1454 = vmatprep.subr.bf16.mxu0 %v1302
    %1455 = vmatpush1.bf16.msra.mxu0 %v1301
    %1456 = vmatprep.subr.bf16.mxu0 %v1299
    %1457 = vmatpush1.bf16.msra.mxu0 %v1298
    %1458 = vmatprep.subr.bf16.mxu0 %v1344
    %1459 = vmatpush2.bf16.msra.mxu0 %v1343
    %1460 = vmatprep.subr.bf16.mxu0 %v1341
    %1461 = vmatpush2.bf16.msra.mxu0 %v1340
    %1462 = vmatprep.subr.bf16.mxu0 %v1338
    %1463 = vmatpush2.bf16.msra.mxu0 %v1337
    %1464 = vmatprep.subr.bf16.mxu0 %v1335
    %1465 = vmatpush2.bf16.msra.mxu0 %v1334
    %1466 = vmatprep.subr.bf16.mxu0 %v1332
    %1467 = vmatpush2.bf16.msra.mxu0 %v1331
    %1468 = vmatprep.subr.bf16.mxu0 %v1329
    %1469 = vmatpush2.bf16.msra.mxu0 %v1328
    %1470 = vmatprep.subr.bf16.mxu0 %v1326
    %1471 = vmatpush2.bf16.msra.mxu0 %v1325
    %1472 = vmatprep.subr.bf16.mxu0 %v1323
    %1473 = vmatpush2.bf16.msra.mxu0 %v1322
    %1474 = vmatprep.mubr.bf16.mxu0 %v1040
    %1475 = vmatmul.mubr.bf16.gmra.mxu0 %v1039
    %v1476 = vpop.f32.mrf.mxu0
    %v1477 = vadd.f32 %v1046, %v1476
    %v1478 = vpop.f32.mrf.mxu0
    %v1479 = vadd.f32 %v1050, %v1478
    %v1480 = vpop.f32.mrf.mxu0
    %v1481 = vadd.f32 %v1046, %v1480
    %v1482 = vpop.f32.mrf.mxu0
    %v1483 = vadd.f32 %v1050, %v1482
    %1484 = vdwg.mxu0
    %1485 = vmatprep.subr.bf16.mxu0 %v1368
    %1486 = vmatpush1.bf16.msra.mxu0 %v1367
    %1487 = vmatprep.subr.bf16.mxu0 %v1365
    %1488 = vmatpush1.bf16.msra.mxu0 %v1364
    %1489 = vmatprep.subr.bf16.mxu0 %v1362
    %1490 = vmatpush1.bf16.msra.mxu0 %v1361
    %1491 = vmatprep.subr.bf16.mxu0 %v1359
    %1492 = vmatpush1.bf16.msra.mxu0 %v1358
    %1493 = vmatprep.subr.bf16.mxu0 %v1356
    %1494 = vmatpush1.bf16.msra.mxu0 %v1355
    %1495 = vmatprep.subr.bf16.mxu0 %v1353
    %1496 = vmatpush1.bf16.msra.mxu0 %v1352
    %1497 = vmatprep.subr.bf16.mxu0 %v1350
    %1498 = vmatpush1.bf16.msra.mxu0 %v1349
    %1499 = vmatprep.subr.bf16.mxu0 %v1347
    %1500 = vmatpush1.bf16.msra.mxu0 %v1346
    %1501 = vmatprep.subr.bf16.mxu0 0
    %1502 = vmatpush2.bf16.msra.mxu0 0
    %1503 = vmatprep.subr.bf16.mxu0 0
    %1504 = vmatpush2.bf16.msra.mxu0 0
    %1505 = vmatprep.subr.bf16.mxu0 0
    %1506 = vmatpush2.bf16.msra.mxu0 0
    %1507 = vmatprep.subr.bf16.mxu0 0
    %1508 = vmatpush2.bf16.msra.mxu0 0
    %1509 = vmatprep.subr.bf16.mxu0 0
    %1510 = vmatpush2.bf16.msra.mxu0 0
    %1511 = vmatprep.subr.bf16.mxu0 0
    %1512 = vmatpush2.bf16.msra.mxu0 0
    %1513 = vmatprep.subr.bf16.mxu0 0
    %1514 = vmatpush2.bf16.msra.mxu0 0
    %1515 = vmatprep.subr.bf16.mxu0 0
    %1516 = vmatpush2.bf16.msra.mxu0 0
    %1517 = vmatprep.mubr.bf16.mxu0 0
    %1518 = vmatmul.mubr.bf16.gmra.mxu0 %v1041
    %v1519 = vpop.f32.mrf.mxu0
    %v1520 = vadd.f32 %v1477, %v1519
    %v1521 = vpop.f32.mrf.mxu0
    %v1522 = vadd.f32 %v1479, %v1521
    %v1523 = vpop.f32.mrf.mxu0
    %v1524 = vadd.f32 %v1481, %v1523
    %v1525 = vpop.f32.mrf.mxu0
    %v1526 = vadd.f32 %v1483, %v1525
    %1527 = vdwg.mxu0
    %1528 = vmatprep.subr.bf16.mxu0 0
    %1529 = vmatpush1.bf16.msra.mxu0 %v1321
    %1530 = vmatprep.subr.bf16.mxu0 0
    %1531 = vmatpush1.bf16.msra.mxu0 %v1318
    %1532 = vmatprep.subr.bf16.mxu0 0
    %1533 = vmatpush1.bf16.msra.mxu0 %v1315
    %1534 = vmatprep.subr.bf16.mxu0 0
    %1535 = vmatpush1.bf16.msra.mxu0 %v1312
    %1536 = vmatprep.subr.bf16.mxu0 0
    %1537 = vmatpush1.bf16.msra.mxu0 %v1309
    %1538 = vmatprep.subr.bf16.mxu0 0
    %1539 = vmatpush1.bf16.msra.mxu0 %v1306
    %1540 = vmatprep.subr.bf16.mxu0 0
    %1541 = vmatpush1.bf16.msra.mxu0 %v1303
    %1542 = vmatprep.subr.bf16.mxu0 0
    %1543 = vmatpush1.bf16.msra.mxu0 %v1300
    %1544 = vmatprep.subr.bf16.mxu0 0
    %1545 = vmatpush2.bf16.msra.mxu0 %v1345
    %1546 = vmatprep.subr.bf16.mxu0 0
    %1547 = vmatpush2.bf16.msra.mxu0 %v1342
    %1548 = vmatprep.subr.bf16.mxu0 0
    %1549 = vmatpush2.bf16.msra.mxu0 %v1339
    %1550 = vmatprep.subr.bf16.mxu0 0
    %1551 = vmatpush2.bf16.msra.mxu0 %v1336
    %1552 = vmatprep.subr.bf16.mxu0 0
    %1553 = vmatpush2.bf16.msra.mxu0 %v1333
    %1554 = vmatprep.subr.bf16.mxu0 0
    %1555 = vmatpush2.bf16.msra.mxu0 %v1330
    %1556 = vmatprep.subr.bf16.mxu0 0
    %1557 = vmatpush2.bf16.msra.mxu0 %v1327
    %1558 = vmatprep.subr.bf16.mxu0 0
    %1559 = vmatpush2.bf16.msra.mxu0 %v1324
    %1560 = vmatprep.mubr.bf16.mxu0 %v1040
    %1561 = vmatmul.mubr.bf16.gmra.mxu0 %v1039
    %v1562 = vpop.f32.mrf.mxu0
    %v1563 = vadd.f32 %v1054, %v1562
    %v1564 = vpop.f32.mrf.mxu0
    %v1565 = vpop.f32.mrf.mxu0
    %v1566 = vadd.f32 %v1054, %v1565
    %v1567 = vpop.f32.mrf.mxu0
    %1568 = vdwg.mxu0
    %1569 = vmatprep.subr.bf16.mxu0 0
    %1570 = vmatpush1.bf16.msra.mxu0 %v1369
    %1571 = vmatprep.subr.bf16.mxu0 0
    %1572 = vmatpush1.bf16.msra.mxu0 %v1366
    %1573 = vmatprep.subr.bf16.mxu0 0
    %1574 = vmatpush1.bf16.msra.mxu0 %v1363
    %1575 = vmatprep.subr.bf16.mxu0 0
    %1576 = vmatpush1.bf16.msra.mxu0 %v1360
    %1577 = vmatprep.subr.bf16.mxu0 0
    %1578 = vmatpush1.bf16.msra.mxu0 %v1357
    %1579 = vmatprep.subr.bf16.mxu0 0
    %1580 = vmatpush1.bf16.msra.mxu0 %v1354
    %1581 = vmatprep.subr.bf16.mxu0 0
    %1582 = vmatpush1.bf16.msra.mxu0 %v1351
    %1583 = vmatprep.subr.bf16.mxu0 0
    %1584 = vmatpush1.bf16.msra.mxu0 %v1348
    %1585 = vmatprep.subr.bf16.mxu0 0
    %1586 = vmatpush2.bf16.msra.mxu0 0
    %1587 = vmatprep.subr.bf16.mxu0 0
    %1588 = vmatpush2.bf16.msra.mxu0 0
    %1589 = vmatprep.subr.bf16.mxu0 0
    %1590 = vmatpush2.bf16.msra.mxu0 0
    %1591 = vmatprep.subr.bf16.mxu0 0
    %1592 = vmatpush2.bf16.msra.mxu0 0
    %1593 = vmatprep.subr.bf16.mxu0 0
    %1594 = vmatpush2.bf16.msra.mxu0 0
    %1595 = vmatprep.subr.bf16.mxu0 0
    %1596 = vmatpush2.bf16.msra.mxu0 0
    %1597 = vmatprep.subr.bf16.mxu0 0
    %1598 = vmatpush2.bf16.msra.mxu0 0
    %1599 = vmatprep.subr.bf16.mxu0 0
    %1600 = vmatpush2.bf16.msra.mxu0 0
    %1601 = vmatprep.mubr.bf16.mxu0 0
    %1602 = vmatmul.mubr.bf16.gmra.mxu0 %v1041
    %v1603 = vpop.f32.mrf.mxu0
    %v1604 = vadd.f32 %v1563, %v1603
    %v1605 = vpop.f32.mrf.mxu0
    %v1606 = vpop.f32.mrf.mxu0
    %v1607 = vadd.f32 %v1566, %v1606
    %v1608 = vpop.f32.mrf.mxu0
    %1609 = vdwg.mxu0
    %v1610 = vsub.f32 0.0, %v1520
    %v1611 = vsub.f32 0.0, %v1522
    %v1612 = vsub.f32 0.0, %v1604
    %v1613 = vsub.f32 0.0, %v1524
    %v1614 = vsub.f32 0.0, %v1526
    %v1615 = vsub.f32 0.0, %v1607
    %v1616 = vmul.f32 %v1610, 1.442695
    %v1617 = vpow.pop %v1616
    %v1618 = vmul.f32 %v1611, 1.442695
    %v1619 = vpow.pop %v1618
    %v1620 = vmul.f32 %v1612, 1.442695
    %v1621 = vpow.pop %v1620
    %v1622 = vmul.f32 %v1613, 1.442695
    %v1623 = vpow.pop %v1622
    %v1624 = vmul.f32 %v1614, 1.442695
    %v1625 = vpow.pop %v1624
    %v1626 = vmul.f32 %v1615, 1.442695
    %v1627 = vpow.pop %v1626
    %v1628 = vadd.f32 %v1617, 1.0
    %v1629 = vadd.f32 %v1619, 1.0
    %v1630 = vadd.f32 %v1621, 1.0
    %v1631 = vadd.f32 %v1623, 1.0
    %v1632 = vadd.f32 %v1625, 1.0
    %v1633 = vadd.f32 %v1627, 1.0
    %v1634 = vrcp.pop %v1628
    %v1635 = vrcp.pop %v1629
    %v1636 = vrcp.pop %v1630
    %v1637 = vrcp.pop %v1631
    %v1638 = vrcp.pop %v1632
    %v1639 = vrcp.pop %v1633
    %v1640 = vmul.f32 %v1520, %v1634
    %v1641 = vmul.f32 %v1522, %v1635
    %v1642 = vmul.f32 %v1604, %v1636
    %v1643 = vmul.f32 %v1524, %v1637
    %v1644 = vmul.f32 %v1526, %v1638
    %v1645 = vmul.f32 %v1607, %v1639
    %s1646 = scalar_lea.vmem [#allocation6], 1152
    %v1647 = vld [vmem:[%s1646] sm:$0xff]
    %v1648 = vld [vmem:[%s1646 + $0x8] sm:$0xf]
    %v1649 = vld [vmem:[%s1646 + $0xc] sm:$0xff]
    %v1650 = vld [vmem:[%s1646 + $0x14] sm:$0xf]
    %v1651 = vld [vmem:[%s1646 + $0x18] sm:$0xff]
    %v1652 = vld [vmem:[%s1646 + $0x20] sm:$0xf]
    %v1653 = vld [vmem:[%s1646 + $0x24] sm:$0xff]
    %v1654 = vld [vmem:[%s1646 + $0x2c] sm:$0xf]
    %v1655 = vld [vmem:[%s1646 + $0x30] sm:$0xff]
    %v1656 = vld [vmem:[%s1646 + $0x38] sm:$0xf]
    %v1657 = vld [vmem:[%s1646 + $0x3c] sm:$0xff]
    %v1658 = vld [vmem:[%s1646 + $0x44] sm:$0xf]
    %v1659 = vld [vmem:[%s1646 + $0x48] sm:$0xff]
    %v1660 = vld [vmem:[%s1646 + $0x50] sm:$0xf]
    %v1661 = vld [vmem:[%s1646 + $0x54] sm:$0xff]
    %v1662 = vld [vmem:[%s1646 + $0x5c] sm:$0xf]
    %v1663 = vld [vmem:[%s1646 + $0x60] sm:$0xff]
    %v1664 = vld [vmem:[%s1646 + $0x68] sm:$0xf]
    %v1665 = vld [vmem:[%s1646 + $0x6c] sm:$0xff]
    %v1666 = vld [vmem:[%s1646 + $0x74] sm:$0xf]
    %v1667 = vld [vmem:[%s1646 + $0x78] sm:$0xff]
    %v1668 = vld [vmem:[%s1646 + $0x80] sm:$0xf]
    %v1669 = vld [vmem:[%s1646 + $0x84] sm:$0xff]
    %v1670 = vld [vmem:[%s1646 + $0x8c] sm:$0xf]
    %v1671 = vld [vmem:[%s1646 + $0x90] sm:$0xff]
    %v1672 = vld [vmem:[%s1646 + $0x98] sm:$0xf]
    %v1673 = vld [vmem:[%s1646 + $0x9c] sm:$0xff]
    %v1674 = vld [vmem:[%s1646 + $0xa4] sm:$0xf]
    %v1675 = vld [vmem:[%s1646 + $0xa8] sm:$0xff]
    %v1676 = vld [vmem:[%s1646 + $0xb0] sm:$0xf]
    %v1677 = vld [vmem:[%s1646 + $0xb4] sm:$0xff]
    %v1678 = vld [vmem:[%s1646 + $0xbc] sm:$0xf]
    %v1679 = vld [vmem:[%s1646 + $0xc0] sm:$0xff]
    %v1680 = vld [vmem:[%s1646 + $0xc8] sm:$0xf]
    %v1681 = vld [vmem:[%s1646 + $0xcc] sm:$0xff]
    %v1682 = vld [vmem:[%s1646 + $0xd4] sm:$0xf]
    %v1683 = vld [vmem:[%s1646 + $0xd8] sm:$0xff]
    %v1684 = vld [vmem:[%s1646 + $0xe0] sm:$0xf]
    %v1685 = vld [vmem:[%s1646 + $0xe4] sm:$0xff]
    %v1686 = vld [vmem:[%s1646 + $0xec] sm:$0xf]
    %v1687 = vld [vmem:[%s1646 + $0xf0] sm:$0xff]
    %v1688 = vld [vmem:[%s1646 + $0xf8] sm:$0xf]
    %v1689 = vld [vmem:[%s1646 + $0xfc] sm:$0xff]
    %v1690 = vld [vmem:[%s1646 + $0x104] sm:$0xf]
    %v1691 = vld [vmem:[%s1646 + $0x108] sm:$0xff]
    %v1692 = vld [vmem:[%s1646 + $0x110] sm:$0xf]
    %v1693 = vld [vmem:[%s1646 + $0x114] sm:$0xff]
    %v1694 = vld [vmem:[%s1646 + $0x11c] sm:$0xf]
    %v1695 = vld [vmem:[%s1646 + $0x120] sm:$0xff]
    %v1696 = vld [vmem:[%s1646 + $0x128] sm:$0xf]
    %v1697 = vld [vmem:[%s1646 + $0x12c] sm:$0xff]
    %v1698 = vld [vmem:[%s1646 + $0x134] sm:$0xf]
    %v1699 = vld [vmem:[%s1646 + $0x138] sm:$0xff]
    %v1700 = vld [vmem:[%s1646 + $0x140] sm:$0xf]
    %v1701 = vld [vmem:[%s1646 + $0x144] sm:$0xff]
    %v1702 = vld [vmem:[%s1646 + $0x14c] sm:$0xf]
    %v1703 = vld [vmem:[%s1646 + $0x150] sm:$0xff]
    %v1704 = vld [vmem:[%s1646 + $0x158] sm:$0xf]
    %v1705 = vld [vmem:[%s1646 + $0x15c] sm:$0xff]
    %v1706 = vld [vmem:[%s1646 + $0x164] sm:$0xf]
    %v1707 = vld [vmem:[%s1646 + $0x168] sm:$0xff]
    %v1708 = vld [vmem:[%s1646 + $0x170] sm:$0xf]
    %v1709 = vld [vmem:[%s1646 + $0x174] sm:$0xff]
    %v1710 = vld [vmem:[%s1646 + $0x17c] sm:$0xf]
    %v1711 = vld [vmem:[%s1646 + $0x180] sm:$0xff]
    %v1712 = vld [vmem:[%s1646 + $0x188] sm:$0xf]
    %v1713 = vld [vmem:[%s1646 + $0x18c] sm:$0xff]
    %v1714 = vld [vmem:[%s1646 + $0x194] sm:$0xf]
    %v1715 = vld [vmem:[%s1646 + $0x198] sm:$0xff]
    %v1716 = vld [vmem:[%s1646 + $0x1a0] sm:$0xf]
    %v1717 = vld [vmem:[%s1646 + $0x1a4] sm:$0xff]
    %v1718 = vld [vmem:[%s1646 + $0x1ac] sm:$0xf]
    %v1719 = vld [vmem:[%s1646 + $0x1b0] sm:$0xff]
    %v1720 = vld [vmem:[%s1646 + $0x1b8] sm:$0xf]
    %v1721 = vld [vmem:[%s1646 + $0x1bc] sm:$0xff]
    %v1722 = vld [vmem:[%s1646 + $0x1c4] sm:$0xf]
    %v1723 = vld [vmem:[%s1646 + $0x1c8] sm:$0xff]
    %v1724 = vld [vmem:[%s1646 + $0x1d0] sm:$0xf]
    %v1725 = vld [vmem:[%s1646 + $0x1d4] sm:$0xff]
    %v1726 = vld [vmem:[%s1646 + $0x1dc] sm:$0xf]
    %v1727 = vld [vmem:[%s1646 + $0x1e0] sm:$0xff]
    %v1728 = vld [vmem:[%s1646 + $0x1e8] sm:$0xf]
    %v1729 = vld [vmem:[%s1646 + $0x1ec] sm:$0xff]
    %v1730 = vld [vmem:[%s1646 + $0x1f4] sm:$0xf]
    %v1731 = vld [vmem:[%s1646 + $0x1f8] sm:$0xff]
    %v1732 = vld [vmem:[%s1646 + $0x200] sm:$0xf]
    %v1733 = vld [vmem:[%s1646 + $0x204] sm:$0xff]
    %v1734 = vld [vmem:[%s1646 + $0x20c] sm:$0xf]
    %v1735 = vld [vmem:[%s1646 + $0x210] sm:$0xff]
    %v1736 = vld [vmem:[%s1646 + $0x218] sm:$0xf]
    %v1737 = vld [vmem:[%s1646 + $0x21c] sm:$0xff]
    %v1738 = vld [vmem:[%s1646 + $0x224] sm:$0xf]
    %v1739 = vld [vmem:[%s1646 + $0x228] sm:$0xff]
    %v1740 = vld [vmem:[%s1646 + $0x230] sm:$0xf]
    %v1741 = vld [vmem:[%s1646 + $0x234] sm:$0xff]
    %v1742 = vld [vmem:[%s1646 + $0x23c] sm:$0xf]
    %s1743 = scalar_lea.vmem [#allocation7], 3
    %v1744 = vld [vmem:[%s1743] ss:$4 sm:$0x7]
    %v1745 = vpack.c.bf16 %v1643, %v1640
    %v1746 = vpack.c.bf16 %v1644, %v1641
    %v1747 = vpack.c.bf16 %v1645, %v1642
    %v1749 = vlaneseq
    %v1750 = vshrl.u32 %v1749, 7
    %v1751 = vsub.s32 0, %v1750
    %v1752 = vrot.slane %v1744, %v1751
    %v1753 = vlaneseq
    %v1754 = vshrl.u32 %v1753, 7
    %v1755 = vsub.s32 1, %v1754
    %v1756 = vrot.slane %v1744, %v1755
    %v1757 = vlaneseq
    %v1758 = vshrl.u32 %v1757, 7
    %v1759 = vsub.s32 2, %v1758
    %v1760 = vrot.slane %v1744, %v1759
    %v1860 = vunpack.c.l.b16 %v1647
    %v1861 = vunpack.c.h.b16 %v1647
    %v1862 = vunpack.c.l.b16 %v1648
    %v1863 = vunpack.c.l.b16 %v1649
    %v1864 = vunpack.c.h.b16 %v1649
    %v1865 = vunpack.c.l.b16 %v1650
    %v1866 = vunpack.c.l.b16 %v1651
    %v1867 = vunpack.c.h.b16 %v1651
    %v1868 = vunpack.c.l.b16 %v1652
    %v1869 = vunpack.c.l.b16 %v1653
    %v1870 = vunpack.c.h.b16 %v1653
    %v1871 = vunpack.c.l.b16 %v1654
    %v1872 = vunpack.c.l.b16 %v1655
    %v1873 = vunpack.c.h.b16 %v1655
    %v1874 = vunpack.c.l.b16 %v1656
    %v1875 = vunpack.c.l.b16 %v1657
    %v1876 = vunpack.c.h.b16 %v1657
    %v1877 = vunpack.c.l.b16 %v1658
    %v1878 = vunpack.c.l.b16 %v1659
    %v1879 = vunpack.c.h.b16 %v1659
    %v1880 = vunpack.c.l.b16 %v1660
    %v1881 = vunpack.c.l.b16 %v1661
    %v1882 = vunpack.c.h.b16 %v1661
    %v1883 = vunpack.c.l.b16 %v1662
    %v1884 = vunpack.c.l.b16 %v1663
    %v1885 = vunpack.c.h.b16 %v1663
    %v1886 = vunpack.c.l.b16 %v1664
    %v1887 = vunpack.c.l.b16 %v1665
    %v1888 = vunpack.c.h.b16 %v1665
    %v1889 = vunpack.c.l.b16 %v1666
    %v1890 = vunpack.c.l.b16 %v1667
    %v1891 = vunpack.c.h.b16 %v1667
    %v1892 = vunpack.c.l.b16 %v1668
    %v1893 = vunpack.c.l.b16 %v1669
    %v1894 = vunpack.c.h.b16 %v1669
    %v1895 = vunpack.c.l.b16 %v1670
    %v1896 = vunpack.c.l.b16 %v1671
    %v1897 = vunpack.c.h.b16 %v1671
    %v1898 = vunpack.c.l.b16 %v1672
    %v1899 = vunpack.c.l.b16 %v1673
    %v1900 = vunpack.c.h.b16 %v1673
    %v1901 = vunpack.c.l.b16 %v1674
    %v1902 = vunpack.c.l.b16 %v1675
    %v1903 = vunpack.c.h.b16 %v1675
    %v1904 = vunpack.c.l.b16 %v1676
    %v1905 = vunpack.c.l.b16 %v1677
    %v1906 = vunpack.c.h.b16 %v1677
    %v1907 = vunpack.c.l.b16 %v1678
    %v1908 = vunpack.c.l.b16 %v1679
    %v1909 = vunpack.c.h.b16 %v1679
    %v1910 = vunpack.c.l.b16 %v1680
    %v1911 = vunpack.c.l.b16 %v1681
    %v1912 = vunpack.c.h.b16 %v1681
    %v1913 = vunpack.c.l.b16 %v1682
    %v1914 = vunpack.c.l.b16 %v1683
    %v1915 = vunpack.c.h.b16 %v1683
    %v1916 = vunpack.c.l.b16 %v1684
    %v1917 = vunpack.c.l.b16 %v1685
    %v1918 = vunpack.c.h.b16 %v1685
    %v1919 = vunpack.c.l.b16 %v1686
    %v1920 = vunpack.c.l.b16 %v1687
    %v1921 = vunpack.c.h.b16 %v1687
    %v1922 = vunpack.c.l.b16 %v1688
    %v1923 = vunpack.c.l.b16 %v1689
    %v1924 = vunpack.c.h.b16 %v1689
    %v1925 = vunpack.c.l.b16 %v1690
    %v1926 = vunpack.c.l.b16 %v1691
    %v1927 = vunpack.c.h.b16 %v1691
    %v1928 = vunpack.c.l.b16 %v1692
    %v1929 = vunpack.c.l.b16 %v1693
    %v1930 = vunpack.c.h.b16 %v1693
    %v1931 = vunpack.c.l.b16 %v1694
    %v1932 = vunpack.c.l.b16 %v1695
    %v1933 = vunpack.c.h.b16 %v1695
    %v1934 = vunpack.c.l.b16 %v1696
    %v1935 = vunpack.c.l.b16 %v1697
    %v1936 = vunpack.c.h.b16 %v1697
    %v1937 = vunpack.c.l.b16 %v1698
    %v1938 = vunpack.c.l.b16 %v1699
    %v1939 = vunpack.c.h.b16 %v1699
    %v1940 = vunpack.c.l.b16 %v1700
    %v1941 = vunpack.c.l.b16 %v1701
    %v1942 = vunpack.c.h.b16 %v1701
    %v1943 = vunpack.c.l.b16 %v1702
    %v1944 = vunpack.c.l.b16 %v1703
    %v1945 = vunpack.c.h.b16 %v1703
    %v1946 = vunpack.c.l.b16 %v1704
    %v1947 = vunpack.c.l.b16 %v1705
    %v1948 = vunpack.c.h.b16 %v1705
    %v1949 = vunpack.c.l.b16 %v1706
    %v1950 = vunpack.c.l.b16 %v1707
    %v1951 = vunpack.c.h.b16 %v1707
    %v1952 = vunpack.c.l.b16 %v1708
    %v1953 = vunpack.c.l.b16 %v1709
    %v1954 = vunpack.c.h.b16 %v1709
    %v1955 = vunpack.c.l.b16 %v1710
    %v1956 = vunpack.c.l.b16 %v1711
    %v1957 = vunpack.c.h.b16 %v1711
    %v1958 = vunpack.c.l.b16 %v1712
    %v1959 = vunpack.c.l.b16 %v1713
    %v1960 = vunpack.c.h.b16 %v1713
    %v1961 = vunpack.c.l.b16 %v1714
    %v1962 = vunpack.c.l.b16 %v1715
    %v1963 = vunpack.c.h.b16 %v1715
    %v1964 = vunpack.c.l.b16 %v1716
    %v1965 = vunpack.c.l.b16 %v1717
    %v1966 = vunpack.c.h.b16 %v1717
    %v1967 = vunpack.c.l.b16 %v1718
    %v1968 = vunpack.c.l.b16 %v1719
    %v1969 = vunpack.c.h.b16 %v1719
    %v1970 = vunpack.c.l.b16 %v1720
    %v1971 = vunpack.c.l.b16 %v1721
    %v1972 = vunpack.c.h.b16 %v1721
    %v1973 = vunpack.c.l.b16 %v1722
    %v1974 = vunpack.c.l.b16 %v1723
    %v1975 = vunpack.c.h.b16 %v1723
    %v1976 = vunpack.c.l.b16 %v1724
    %v1977 = vunpack.c.l.b16 %v1725
    %v1978 = vunpack.c.h.b16 %v1725
    %v1979 = vunpack.c.l.b16 %v1726
    %v1980 = vunpack.c.l.b16 %v1727
    %v1981 = vunpack.c.h.b16 %v1727
    %v1982 = vunpack.c.l.b16 %v1728
    %v1983 = vunpack.c.l.b16 %v1729
    %v1984 = vunpack.c.h.b16 %v1729
    %v1985 = vunpack.c.l.b16 %v1730
    %v1986 = vunpack.c.l.b16 %v1731
    %v1987 = vunpack.c.h.b16 %v1731
    %v1988 = vunpack.c.l.b16 %v1732
    %v1989 = vunpack.c.l.b16 %v1733
    %v1990 = vunpack.c.h.b16 %v1733
    %v1991 = vunpack.c.l.b16 %v1734
    %v1992 = vunpack.c.l.b16 %v1735
    %v1993 = vunpack.c.h.b16 %v1735
    %v1994 = vunpack.c.l.b16 %v1736
    %v1995 = vunpack.c.l.b16 %v1737
    %v1996 = vunpack.c.h.b16 %v1737
    %v1997 = vunpack.c.l.b16 %v1738
    %v1998 = vunpack.c.l.b16 %v1739
    %v1999 = vunpack.c.h.b16 %v1739
    %v2000 = vunpack.c.l.b16 %v1740
    %v2001 = vunpack.c.l.b16 %v1741
    %v2002 = vunpack.c.h.b16 %v1741
    %v2003 = vunpack.c.l.b16 %v1742
    %v2004 = vpack.c.b16 %v1863, %v1860
    %v2005 = vpack.c.b16 %v1864, %v1861
    %v2006 = vpack.c.b16 %v1865, %v1862
    %v2007 = vpack.c.b16 %v1869, %v1866
    %v2008 = vpack.c.b16 %v1870, %v1867
    %v2009 = vpack.c.b16 %v1871, %v1868
    %v2010 = vpack.c.b16 %v1875, %v1872
    %v2011 = vpack.c.b16 %v1876, %v1873
    %v2012 = vpack.c.b16 %v1877, %v1874
    %v2013 = vpack.c.b16 %v1881, %v1878
    %v2014 = vpack.c.b16 %v1882, %v1879
    %v2015 = vpack.c.b16 %v1883, %v1880
    %v2016 = vpack.c.b16 %v1887, %v1884
    %v2017 = vpack.c.b16 %v1888, %v1885
    %v2018 = vpack.c.b16 %v1889, %v1886
    %v2019 = vpack.c.b16 %v1893, %v1890
    %v2020 = vpack.c.b16 %v1894, %v1891
    %v2021 = vpack.c.b16 %v1895, %v1892
    %v2022 = vpack.c.b16 %v1899, %v1896
    %v2023 = vpack.c.b16 %v1900, %v1897
    %v2024 = vpack.c.b16 %v1901, %v1898
    %v2025 = vpack.c.b16 %v1905, %v1902
    %v2026 = vpack.c.b16 %v1906, %v1903
    %v2027 = vpack.c.b16 %v1907, %v1904
    %v2028 = vpack.c.b16 %v1911, %v1908
    %v2029 = vpack.c.b16 %v1912, %v1909
    %v2030 = vpack.c.b16 %v1913, %v1910
    %v2031 = vpack.c.b16 %v1917, %v1914
    %v2032 = vpack.c.b16 %v1918, %v1915
    %v2033 = vpack.c.b16 %v1919, %v1916
    %v2034 = vpack.c.b16 %v1923, %v1920
    %v2035 = vpack.c.b16 %v1924, %v1921
    %v2036 = vpack.c.b16 %v1925, %v1922
    %v2037 = vpack.c.b16 %v1929, %v1926
    %v2038 = vpack.c.b16 %v1930, %v1927
    %v2039 = vpack.c.b16 %v1931, %v1928
    %v2040 = vpack.c.b16 %v1935, %v1932
    %v2041 = vpack.c.b16 %v1936, %v1933
    %v2042 = vpack.c.b16 %v1937, %v1934
    %v2043 = vpack.c.b16 %v1941, %v1938
    %v2044 = vpack.c.b16 %v1942, %v1939
    %v2045 = vpack.c.b16 %v1943, %v1940
    %v2046 = vpack.c.b16 %v1947, %v1944
    %v2047 = vpack.c.b16 %v1948, %v1945
    %v2048 = vpack.c.b16 %v1949, %v1946
    %v2049 = vpack.c.b16 %v1953, %v1950
    %v2050 = vpack.c.b16 %v1954, %v1951
    %v2051 = vpack.c.b16 %v1955, %v1952
    %v2052 = vpack.c.b16 %v1959, %v1956
    %v2053 = vpack.c.b16 %v1960, %v1957
    %v2054 = vpack.c.b16 %v1961, %v1958
    %v2055 = vpack.c.b16 %v1965, %v1962
    %v2056 = vpack.c.b16 %v1966, %v1963
    %v2057 = vpack.c.b16 %v1967, %v1964
    %v2058 = vpack.c.b16 %v1971, %v1968
    %v2059 = vpack.c.b16 %v1972, %v1969
    %v2060 = vpack.c.b16 %v1973, %v1970
    %v2061 = vpack.c.b16 %v1977, %v1974
    %v2062 = vpack.c.b16 %v1978, %v1975
    %v2063 = vpack.c.b16 %v1979, %v1976
    %v2064 = vpack.c.b16 %v1983, %v1980
    %v2065 = vpack.c.b16 %v1984, %v1981
    %v2066 = vpack.c.b16 %v1985, %v1982
    %v2067 = vpack.c.b16 %v1989, %v1986
    %v2068 = vpack.c.b16 %v1990, %v1987
    %v2069 = vpack.c.b16 %v1991, %v1988
    %v2070 = vpack.c.b16 %v1995, %v1992
    %v2071 = vpack.c.b16 %v1996, %v1993
    %v2072 = vpack.c.b16 %v1997, %v1994
    %v2073 = vpack.c.b16 %v2001, %v1998
    %v2074 = vpack.c.b16 %v2002, %v1999
    %v2075 = vpack.c.b16 %v2003, %v2000
    %2148 = vmatprep.subr.bf16.mxu0 %v2026
    %2149 = vmatpush1.bf16.msra.mxu0 %v2025
    %2150 = vmatprep.subr.bf16.mxu0 %v2023
    %2151 = vmatpush1.bf16.msra.mxu0 %v2022
    %2152 = vmatprep.subr.bf16.mxu0 %v2020
    %2153 = vmatpush1.bf16.msra.mxu0 %v2019
    %2154 = vmatprep.subr.bf16.mxu0 %v2017
    %2155 = vmatpush1.bf16.msra.mxu0 %v2016
    %2156 = vmatprep.subr.bf16.mxu0 %v2014
    %2157 = vmatpush1.bf16.msra.mxu0 %v2013
    %2158 = vmatprep.subr.bf16.mxu0 %v2011
    %2159 = vmatpush1.bf16.msra.mxu0 %v2010
    %2160 = vmatprep.subr.bf16.mxu0 %v2008
    %2161 = vmatpush1.bf16.msra.mxu0 %v2007
    %2162 = vmatprep.subr.bf16.mxu0 %v2005
    %2163 = vmatpush1.bf16.msra.mxu0 %v2004
    %2164 = vmatprep.subr.bf16.mxu0 %v2050
    %2165 = vmatpush2.bf16.msra.mxu0 %v2049
    %2166 = vmatprep.subr.bf16.mxu0 %v2047
    %2167 = vmatpush2.bf16.msra.mxu0 %v2046
    %2168 = vmatprep.subr.bf16.mxu0 %v2044
    %2169 = vmatpush2.bf16.msra.mxu0 %v2043
    %2170 = vmatprep.subr.bf16.mxu0 %v2041
    %2171 = vmatpush2.bf16.msra.mxu0 %v2040
    %2172 = vmatprep.subr.bf16.mxu0 %v2038
    %2173 = vmatpush2.bf16.msra.mxu0 %v2037
    %2174 = vmatprep.subr.bf16.mxu0 %v2035
    %2175 = vmatpush2.bf16.msra.mxu0 %v2034
    %2176 = vmatprep.subr.bf16.mxu0 %v2032
    %2177 = vmatpush2.bf16.msra.mxu0 %v2031
    %2178 = vmatprep.subr.bf16.mxu0 %v2029
    %2179 = vmatpush2.bf16.msra.mxu0 %v2028
    %2180 = vmatprep.mubr.bf16.mxu0 %v1746
    %2181 = vmatmul.mubr.bf16.gmra.mxu0 %v1745
    %v2182 = vpop.f32.mrf.mxu0
    %v2183 = vadd.f32 %v1752, %v2182
    %v2184 = vpop.f32.mrf.mxu0
    %v2185 = vadd.f32 %v1756, %v2184
    %v2186 = vpop.f32.mrf.mxu0
    %v2187 = vadd.f32 %v1752, %v2186
    %v2188 = vpop.f32.mrf.mxu0
    %v2189 = vadd.f32 %v1756, %v2188
    %2190 = vdwg.mxu0
    %2191 = vmatprep.subr.bf16.mxu0 %v2074
    %2192 = vmatpush1.bf16.msra.mxu0 %v2073
    %2193 = vmatprep.subr.bf16.mxu0 %v2071
    %2194 = vmatpush1.bf16.msra.mxu0 %v2070
    %2195 = vmatprep.subr.bf16.mxu0 %v2068
    %2196 = vmatpush1.bf16.msra.mxu0 %v2067
    %2197 = vmatprep.subr.bf16.mxu0 %v2065
    %2198 = vmatpush1.bf16.msra.mxu0 %v2064
    %2199 = vmatprep.subr.bf16.mxu0 %v2062
    %2200 = vmatpush1.bf16.msra.mxu0 %v2061
    %2201 = vmatprep.subr.bf16.mxu0 %v2059
    %2202 = vmatpush1.bf16.msra.mxu0 %v2058
    %2203 = vmatprep.subr.bf16.mxu0 %v2056
    %2204 = vmatpush1.bf16.msra.mxu0 %v2055
    %2205 = vmatprep.subr.bf16.mxu0 %v2053
    %2206 = vmatpush1.bf16.msra.mxu0 %v2052
    %2207 = vmatprep.subr.bf16.mxu0 0
    %2208 = vmatpush2.bf16.msra.mxu0 0
    %2209 = vmatprep.subr.bf16.mxu0 0
    %2210 = vmatpush2.bf16.msra.mxu0 0
    %2211 = vmatprep.subr.bf16.mxu0 0
    %2212 = vmatpush2.bf16.msra.mxu0 0
    %2213 = vmatprep.subr.bf16.mxu0 0
    %2214 = vmatpush2.bf16.msra.mxu0 0
    %2215 = vmatprep.subr.bf16.mxu0 0
    %2216 = vmatpush2.bf16.msra.mxu0 0
    %2217 = vmatprep.subr.bf16.mxu0 0
    %2218 = vmatpush2.bf16.msra.mxu0 0
    %2219 = vmatprep.subr.bf16.mxu0 0
    %2220 = vmatpush2.bf16.msra.mxu0 0
    %2221 = vmatprep.subr.bf16.mxu0 0
    %2222 = vmatpush2.bf16.msra.mxu0 0
    %2223 = vmatprep.mubr.bf16.mxu0 0
    %2224 = vmatmul.mubr.bf16.gmra.mxu0 %v1747
    %v2225 = vpop.f32.mrf.mxu0
    %v2226 = vadd.f32 %v2183, %v2225
    %v2227 = vpop.f32.mrf.mxu0
    %v2228 = vadd.f32 %v2185, %v2227
    %v2229 = vpop.f32.mrf.mxu0
    %v2230 = vadd.f32 %v2187, %v2229
    %v2231 = vpop.f32.mrf.mxu0
    %v2232 = vadd.f32 %v2189, %v2231
    %2233 = vdwg.mxu0
    %2234 = vmatprep.subr.bf16.mxu0 0
    %2235 = vmatpush1.bf16.msra.mxu0 %v2027
    %2236 = vmatprep.subr.bf16.mxu0 0
    %2237 = vmatpush1.bf16.msra.mxu0 %v2024
    %2238 = vmatprep.subr.bf16.mxu0 0
    %2239 = vmatpush1.bf16.msra.mxu0 %v2021
    %2240 = vmatprep.subr.bf16.mxu0 0
    %2241 = vmatpush1.bf16.msra.mxu0 %v2018
    %2242 = vmatprep.subr.bf16.mxu0 0
    %2243 = vmatpush1.bf16.msra.mxu0 %v2015
    %2244 = vmatprep.subr.bf16.mxu0 0
    %2245 = vmatpush1.bf16.msra.mxu0 %v2012
    %2246 = vmatprep.subr.bf16.mxu0 0
    %2247 = vmatpush1.bf16.msra.mxu0 %v2009
    %2248 = vmatprep.subr.bf16.mxu0 0
    %2249 = vmatpush1.bf16.msra.mxu0 %v2006
    %2250 = vmatprep.subr.bf16.mxu0 0
    %2251 = vmatpush2.bf16.msra.mxu0 %v2051
    %2252 = vmatprep.subr.bf16.mxu0 0
    %2253 = vmatpush2.bf16.msra.mxu0 %v2048
    %2254 = vmatprep.subr.bf16.mxu0 0
    %2255 = vmatpush2.bf16.msra.mxu0 %v2045
    %2256 = vmatprep.subr.bf16.mxu0 0
    %2257 = vmatpush2.bf16.msra.mxu0 %v2042
    %2258 = vmatprep.subr.bf16.mxu0 0
    %2259 = vmatpush2.bf16.msra.mxu0 %v2039
    %2260 = vmatprep.subr.bf16.mxu0 0
    %2261 = vmatpush2.bf16.msra.mxu0 %v2036
    %2262 = vmatprep.subr.bf16.mxu0 0
    %2263 = vmatpush2.bf16.msra.mxu0 %v2033
    %2264 = vmatprep.subr.bf16.mxu0 0
    %2265 = vmatpush2.bf16.msra.mxu0 %v2030
    %2266 = vmatprep.mubr.bf16.mxu0 %v1746
    %2267 = vmatmul.mubr.bf16.gmra.mxu0 %v1745
    %v2268 = vpop.f32.mrf.mxu0
    %v2269 = vadd.f32 %v1760, %v2268
    %v2270 = vpop.f32.mrf.mxu0
    %v2271 = vpop.f32.mrf.mxu0
    %v2272 = vadd.f32 %v1760, %v2271
    %v2273 = vpop.f32.mrf.mxu0
    %2274 = vdwg.mxu0
    %2275 = vmatprep.subr.bf16.mxu0 0
    %2276 = vmatpush1.bf16.msra.mxu0 %v2075
    %2277 = vmatprep.subr.bf16.mxu0 0
    %2278 = vmatpush1.bf16.msra.mxu0 %v2072
    %2279 = vmatprep.subr.bf16.mxu0 0
    %2280 = vmatpush1.bf16.msra.mxu0 %v2069
    %2281 = vmatprep.subr.bf16.mxu0 0
    %2282 = vmatpush1.bf16.msra.mxu0 %v2066
    %2283 = vmatprep.subr.bf16.mxu0 0
    %2284 = vmatpush1.bf16.msra.mxu0 %v2063
    %2285 = vmatprep.subr.bf16.mxu0 0
    %2286 = vmatpush1.bf16.msra.mxu0 %v2060
    %2287 = vmatprep.subr.bf16.mxu0 0
    %2288 = vmatpush1.bf16.msra.mxu0 %v2057
    %2289 = vmatprep.subr.bf16.mxu0 0
    %2290 = vmatpush1.bf16.msra.mxu0 %v2054
    %2291 = vmatprep.subr.bf16.mxu0 0
    %2292 = vmatpush2.bf16.msra.mxu0 0
    %2293 = vmatprep.subr.bf16.mxu0 0
    %2294 = vmatpush2.bf16.msra.mxu0 0
    %2295 = vmatprep.subr.bf16.mxu0 0
    %2296 = vmatpush2.bf16.msra.mxu0 0
    %2297 = vmatprep.subr.bf16.mxu0 0
    %2298 = vmatpush2.bf16.msra.mxu0 0
    %2299 = vmatprep.subr.bf16.mxu0 0
    %2300 = vmatpush2.bf16.msra.mxu0 0
    %2301 = vmatprep.subr.bf16.mxu0 0
    %2302 = vmatpush2.bf16.msra.mxu0 0
    %2303 = vmatprep.subr.bf16.mxu0 0
    %2304 = vmatpush2.bf16.msra.mxu0 0
    %2305 = vmatprep.subr.bf16.mxu0 0
    %2306 = vmatpush2.bf16.msra.mxu0 0
    %2307 = vmatprep.mubr.bf16.mxu0 0
    %2308 = vmatmul.mubr.bf16.gmra.mxu0 %v1747
    %v2309 = vpop.f32.mrf.mxu0
    %v2310 = vadd.f32 %v2269, %v2309
    %v2311 = vpop.f32.mrf.mxu0
    %v2312 = vpop.f32.mrf.mxu0
    %v2313 = vadd.f32 %v2272, %v2312
    %v2314 = vpop.f32.mrf.mxu0
    %2315 = vdwg.mxu0
    %2316 = vst [vmem:[%s4] sm:$0xff] %v2226
    %2317 = vst [vmem:[%s4 + $0x8] sm:$0xff] %v2228
    %2318 = vst [vmem:[%s4 + $0x10] sm:$0xff] %v2310
    %2319 = vst [vmem:[%s4 + $0x18] sm:$0xff] %v2230
    %2320 = vst [vmem:[%s4 + $0x20] sm:$0xff] %v2232
    %2321 = vst [vmem:[%s4 + $0x28] sm:$0xff] %v2313
    // Predicated region
    $region34: #{mlp_forward.1} parent=1 // pred_check
      _
    $region35: #{mlp_forward.1} parent=1 // pred_check_branch
      %2323 = sbr.rel (0) target = $region37
    $region36: #{mlp_forward.1} parent=1 // pred_region
      _
    $region37: #{mlp_forward.1} parent=1 // pred_fallthru
      _
    // Predicated region
    $region38: #{mlp_forward.1} parent=1 // pred_check
      _
    $region39: #{mlp_forward.1} parent=1 // pred_check_branch
      %2325 = sbr.rel (0) target = $region41
    $region40: #{mlp_forward.1} parent=1 // pred_region
      _
    $region41: #{mlp_forward.1} parent=1 // pred_fallthru
      _
    %2326 = vsyncpa [#allocation3], 1
    %2327 = vsyncpa [#allocation5], 1
    %2328 = vsyncpa [#allocation8], 1

</llo_original>
